<compile_context>
chip_gen: v7x
topology: tpu7x:2x2x1
jax: 0.10.0
libtpu: 0.0.40
codegen_flags: <defaults>
</compile_context>

<pallas_src>
import functools
import math

import jax
import jax.numpy as jnp
from jax.experimental import pallas as pl
from jax.experimental.pallas import tpu as pltpu

IN_DIM = 256          # input feature width
G_HID = 512           # gaussian head hidden
FUT = 80              # future_len
TRAJ_DIM = FUT * 4    # 320
S_HID = 64            # score head hidden
S_PAD = 128           # score output padded to one full lane vreg


def _round_up(x, m):
    return ((x + m - 1) // m) * m


def _elu(v):
    # torch.nn.ELU(alpha=1.0); clamp the exp argument so the discarded branch
    # never overflows.
    return jnp.where(v > 0, v, jnp.exp(jnp.minimum(v, 0.0)) - 1.0)


# ----------------------------------------------------------------------------
# Pallas kernel: both heads on one (g_tile, 256) row block
# ----------------------------------------------------------------------------
def _gmm_kernel(x_ref, wg1_ref, bg1_ref, wg2_ref, bg2_ref,
                ws1_ref, bs1_ref, ws2_ref, bs2_ref,
                traj_ref, score_ref):
    x = x_ref[...]                                                # (gt, 256) bf16

    # --- gaussian head: Linear(256,512) -> ELU -> [Dropout: identity] -> Linear(512,320)
    h = jnp.dot(x, wg1_ref[...],
                preferred_element_type=jnp.float32) + bg1_ref[...]   # (gt, 512) f32
    h = _elu(h)
    t = jnp.dot(h.astype(jnp.bfloat16), wg2_ref[...],
                preferred_element_type=jnp.float32) + bg2_ref[...]   # (gt, 320) f32
    traj_ref[...] = t.astype(traj_ref.dtype)

    # --- score head: Linear(256,64) -> ELU -> Linear(64,1) (padded to 128 lanes)
    s = jnp.dot(x, ws1_ref[...],
                preferred_element_type=jnp.float32) + bs1_ref[...]   # (gt, 64) f32
    s = _elu(s)
    sc = jnp.dot(s.astype(jnp.bfloat16), ws2_ref[...],
                 preferred_element_type=jnp.float32) + bs2_ref[...]  # (gt, 128) f32
    score_ref[...] = sc.astype(score_ref.dtype)


# ----------------------------------------------------------------------------
# Wrapper
# ----------------------------------------------------------------------------
@functools.partial(jax.jit, static_argnames=("g_tile",))
def gmm_predictor(x, wg1, bg1, wg2, bg2, ws1, bs1, ws2, bs2, g_tile=256):
    B, N, M, D = x.shape
    assert D == IN_DIM, D
    G = B * N * M
    x_flat = x.reshape(G, D).astype(jnp.bfloat16)   # bf16 halves DMA + VMEM

    # Tile sizing: multiple of 8 rows, capped by the (padded) problem size,
    # and split so the grid has >=2 steps (keeps both v7x TensorCores busy).
    g8 = _round_up(G, 8)
    g_eff = min(g_tile, g8)
    if g8 // g_eff < 2 and g8 >= 16:
        g_eff = _round_up((g8 + 1) // 2, 8)
    Gp = _round_up(G, g_eff)
    if Gp != G:
        x_flat = jnp.pad(x_flat, ((0, Gp - G), (0, 0)))

    # Weights -> bf16 once (MXU-native rate); biases stay f32 (post-accumulation add).
    wg1b = wg1.astype(jnp.bfloat16)
    wg2b = wg2.astype(jnp.bfloat16)
    ws1b = ws1.astype(jnp.bfloat16)
    ws2p = jnp.zeros((S_HID, S_PAD), jnp.bfloat16).at[:, :1].set(
        ws2.astype(jnp.bfloat16))
    bs2p = jnp.zeros((1, S_PAD), jnp.float32).at[:, :1].set(
        bs2.reshape(1, 1).astype(jnp.float32))
    bg1_2d = bg1.reshape(1, G_HID).astype(jnp.float32)
    bg2_2d = bg2.reshape(1, TRAJ_DIM).astype(jnp.float32)
    bs1_2d = bs1.reshape(1, S_HID).astype(jnp.float32)

    traj_flat, score_flat = pl.pallas_call(
        _gmm_kernel,
        out_shape=(jax.ShapeDtypeStruct((Gp, TRAJ_DIM), jnp.float32),
                   jax.ShapeDtypeStruct((Gp, S_PAD), jnp.float32)),
        grid=(Gp // g_eff,),
        in_specs=[
            pl.BlockSpec((g_eff, IN_DIM), lambda i: (i, 0)),      # x tile
            pl.BlockSpec((IN_DIM, G_HID), lambda i: (0, 0)),      # wg1 (resident)
            pl.BlockSpec((1, G_HID), lambda i: (0, 0)),           # bg1
            pl.BlockSpec((G_HID, TRAJ_DIM), lambda i: (0, 0)),    # wg2
            pl.BlockSpec((1, TRAJ_DIM), lambda i: (0, 0)),        # bg2
            pl.BlockSpec((IN_DIM, S_HID), lambda i: (0, 0)),      # ws1
            pl.BlockSpec((1, S_HID), lambda i: (0, 0)),           # bs1
            pl.BlockSpec((S_HID, S_PAD), lambda i: (0, 0)),       # ws2 (padded)
            pl.BlockSpec((1, S_PAD), lambda i: (0, 0)),           # bs2 (padded)
        ],
        out_specs=(pl.BlockSpec((g_eff, TRAJ_DIM), lambda i: (i, 0)),
                   pl.BlockSpec((g_eff, S_PAD), lambda i: (i, 0))),
        compiler_params=pltpu.CompilerParams(
            dimension_semantics=("parallel",)),
    )(x_flat, wg1b, bg1_2d, wg2b, bg2_2d, ws1b, bs1_2d, ws2p, bs2p)

    traj = traj_flat[:G].reshape(B, N, M, FUT, 4)
    score = score_flat[:G, 0].reshape(B, N, M)
    return traj, score


# ----------------------------------------------------------------------------
# Pure-JAX reference (f32) for a sanity check against the kernel
# ----------------------------------------------------------------------------
def gmm_predictor_ref(x, wg1, bg1, wg2, bg2, ws1, bs1, ws2, bs2):
    B, N, M, _ = x.shape
    h = _elu(x @ wg1 + bg1)
    traj = (h @ wg2 + bg2).reshape(B, N, M, FUT, 4)
    s = _elu(x @ ws1 + bs1)
    score = (s @ ws2 + bs2)[..., 0]
    return traj, score


if __name__ == "__main__":
    key = jax.random.PRNGKey(0)
    (k_x, k_wg1, k_bg1, k_wg2, k_bg2,
     k_ws1, k_bs1, k_ws2, k_bs2) = jax.random.split(key, 9)

    # Small shapes: batch B=2, N=3 agents, M=6 modalities, feature dim 256.
    B, N, M = 2, 3, 6
    x = jax.random.normal(k_x, (B, N, M, IN_DIM), dtype=jnp.float32)

    # Deterministic nn.Linear-style uniform init; weights stored as (in, out).
    lim_g1 = 1.0 / math.sqrt(IN_DIM)
    lim_g2 = 1.0 / math.sqrt(G_HID)
    lim_s1 = 1.0 / math.sqrt(IN_DIM)
    lim_s2 = 1.0 / math.sqrt(S_HID)
    wg1 = jax.random.uniform(k_wg1, (IN_DIM, G_HID), jnp.float32, -lim_g1, lim_g1)
    bg1 = jax.random.uniform(k_bg1, (G_HID,), jnp.float32, -lim_g1, lim_g1)
    wg2 = jax.random.uniform(k_wg2, (G_HID, TRAJ_DIM), jnp.float32, -lim_g2, lim_g2)
    bg2 = jax.random.uniform(k_bg2, (TRAJ_DIM,), jnp.float32, -lim_g2, lim_g2)
    ws1 = jax.random.uniform(k_ws1, (IN_DIM, S_HID), jnp.float32, -lim_s1, lim_s1)
    bs1 = jax.random.uniform(k_bs1, (S_HID,), jnp.float32, -lim_s1, lim_s1)
    ws2 = jax.random.uniform(k_ws2, (S_HID, 1), jnp.float32, -lim_s2, lim_s2)
    bs2 = jax.random.uniform(k_bs2, (1,), jnp.float32, -lim_s2, lim_s2)

    traj, score = gmm_predictor(x, wg1, bg1, wg2, bg2, ws1, bs1, ws2, bs2)
    traj = jax.block_until_ready(traj)
    score = jax.block_until_ready(score)

    ref_traj, ref_score = gmm_predictor_ref(
        x, wg1, bg1, wg2, bg2, ws1, bs1, ws2, bs2)

    assert traj.shape == (B, N, M, FUT, 4), traj.shape
    assert score.shape == (B, N, M), score.shape
    # bf16 MXU operands with f32 accumulation -> relaxed tolerance vs f32 ref.
    assert jnp.allclose(traj, ref_traj, atol=2e-2, rtol=2e-2), (
        float(jnp.max(jnp.abs(traj - ref_traj))))
    assert jnp.allclose(score, ref_score, atol=2e-2, rtol=2e-2), (
        float(jnp.max(jnp.abs(score - ref_score))))

    print("KERNEL_OK")
</pallas_src>

<mosaic_0001>
module attributes {stable_mosaic.version = 11 : i64} {
  func.func @_gmm_kernel(%arg0: i32, %arg1: memref<24x256xbf16, #tpu.memory_space<vmem>>, %arg2: memref<256x512xbf16, #tpu.memory_space<vmem>>, %arg3: memref<1x512xf32, #tpu.memory_space<vmem>>, %arg4: memref<512x320xbf16, #tpu.memory_space<vmem>>, %arg5: memref<1x320xf32, #tpu.memory_space<vmem>>, %arg6: memref<256x64xbf16, #tpu.memory_space<vmem>>, %arg7: memref<1x64xf32, #tpu.memory_space<vmem>>, %arg8: memref<64x128xbf16, #tpu.memory_space<vmem>>, %arg9: memref<1x128xf32, #tpu.memory_space<vmem>>, %arg10: memref<24x320xf32, #tpu.memory_space<vmem>>, %arg11: memref<24x128xf32, #tpu.memory_space<vmem>>) attributes {dimension_semantics = [#tpu.dimension_semantics<parallel>], iteration_bounds = array<i64: 2>, scalar_prefetch = 0 : i64, scratch_operands = 0 : i64, tpu.core_type = #tpu.core_type<tc>, window_params = [{transform_indices = @transform_0, window_bounds = array<i64: 24, 256>}, {pipeline_mode = #tpu.pipeline_mode<synchronous>, transform_indices = @transform_1, window_bounds = array<i64: 256, 512>}, {pipeline_mode = #tpu.pipeline_mode<synchronous>, transform_indices = @transform_2, window_bounds = array<i64: 1, 512>}, {pipeline_mode = #tpu.pipeline_mode<synchronous>, transform_indices = @transform_3, window_bounds = array<i64: 512, 320>}, {pipeline_mode = #tpu.pipeline_mode<synchronous>, transform_indices = @transform_4, window_bounds = array<i64: 1, 320>}, {pipeline_mode = #tpu.pipeline_mode<synchronous>, transform_indices = @transform_5, window_bounds = array<i64: 256, 64>}, {pipeline_mode = #tpu.pipeline_mode<synchronous>, transform_indices = @transform_6, window_bounds = array<i64: 1, 64>}, {pipeline_mode = #tpu.pipeline_mode<synchronous>, transform_indices = @transform_7, window_bounds = array<i64: 64, 128>}, {pipeline_mode = #tpu.pipeline_mode<synchronous>, transform_indices = @transform_8, window_bounds = array<i64: 1, 128>}, {transform_indices = @transform_9, window_bounds = array<i64: 24, 320>}, {transform_indices = @transform_10, window_bounds = array<i64: 24, 128>}]} {
    %c0 = arith.constant 0 : index
    %c0_0 = arith.constant 0 : index
    %0 = vector.load %arg1[%c0, %c0_0] : memref<24x256xbf16, #tpu.memory_space<vmem>>, vector<24x256xbf16>
    %c0_1 = arith.constant 0 : index
    %c0_2 = arith.constant 0 : index
    %1 = vector.load %arg2[%c0_1, %c0_2] : memref<256x512xbf16, #tpu.memory_space<vmem>>, vector<256x512xbf16>
    %cst = arith.constant dense<0.000000e+00> : vector<24x512xf32>
    %2 = tpu.matmul %0, %1, %cst {dimension_numbers = #tpu.dot_dimension_numbers<[1], [0], [0], [1], [0, 0, 1, 1], [], []>} : vector<24x256xbf16>, vector<256x512xbf16>, vector<24x512xf32> -> vector<24x512xf32>
    %c0_3 = arith.constant 0 : index
    %c0_4 = arith.constant 0 : index
    %3 = vector.load %arg3[%c0_3, %c0_4] : memref<1x512xf32, #tpu.memory_space<vmem>>, vector<1x512xf32>
    %4 = vector.broadcast %3 : vector<1x512xf32> to vector<24x512xf32>
    %5 = arith.addf %2, %4 : vector<24x512xf32>
    %cst_5 = arith.constant 0.000000e+00 : f32
    %6 = vector.broadcast %cst_5 : f32 to vector<24x512xf32>
    %7 = arith.cmpf ogt, %5, %6 : vector<24x512xf32>
    %cst_6 = arith.constant 0.000000e+00 : f32
    %8 = vector.broadcast %cst_6 : f32 to vector<24x512xf32>
    %9 = arith.minimumf %5, %8 : vector<24x512xf32>
    %10 = math.exp %9 : vector<24x512xf32>
    %cst_7 = arith.constant 1.000000e+00 : f32
    %11 = vector.broadcast %cst_7 : f32 to vector<24x512xf32>
    %12 = arith.subf %10, %11 : vector<24x512xf32>
    %13 = arith.select %7, %5, %12 : vector<24x512xi1>, vector<24x512xf32>
    %14 = arith.truncf %13 : vector<24x512xf32> to vector<24x512xbf16>
    %c0_8 = arith.constant 0 : index
    %c0_9 = arith.constant 0 : index
    %15 = vector.load %arg4[%c0_8, %c0_9] : memref<512x320xbf16, #tpu.memory_space<vmem>>, vector<512x320xbf16>
    %cst_10 = arith.constant dense<0.000000e+00> : vector<24x320xf32>
    %16 = tpu.matmul %14, %15, %cst_10 {dimension_numbers = #tpu.dot_dimension_numbers<[1], [0], [0], [1], [0, 0, 1, 1], [], []>} : vector<24x512xbf16>, vector<512x320xbf16>, vector<24x320xf32> -> vector<24x320xf32>
    %c0_11 = arith.constant 0 : index
    %c0_12 = arith.constant 0 : index
    %17 = vector.load %arg5[%c0_11, %c0_12] : memref<1x320xf32, #tpu.memory_space<vmem>>, vector<1x320xf32>
    %18 = vector.broadcast %17 : vector<1x320xf32> to vector<24x320xf32>
    %19 = arith.addf %16, %18 : vector<24x320xf32>
    %c0_13 = arith.constant 0 : index
    %c0_14 = arith.constant 0 : index
    %20 = vector.load %arg10[%c0_13, %c0_14] : memref<24x320xf32, #tpu.memory_space<vmem>>, vector<24x320xf32>
    tpu.vector_store %arg10[%c0_13, %c0_14], %19 {strides = array<i32>} : memref<24x320xf32, #tpu.memory_space<vmem>>, vector<24x320xf32>,
    %c0_15 = arith.constant 0 : index
    %c0_16 = arith.constant 0 : index
    %21 = vector.load %arg6[%c0_15, %c0_16] : memref<256x64xbf16, #tpu.memory_space<vmem>>, vector<256x64xbf16>
    %cst_17 = arith.constant dense<0.000000e+00> : vector<24x64xf32>
    %22 = tpu.matmul %0, %21, %cst_17 {dimension_numbers = #tpu.dot_dimension_numbers<[1], [0], [0], [1], [0, 0, 1, 1], [], []>} : vector<24x256xbf16>, vector<256x64xbf16>, vector<24x64xf32> -> vector<24x64xf32>
    %c0_18 = arith.constant 0 : index
    %c0_19 = arith.constant 0 : index
    %23 = vector.load %arg7[%c0_18, %c0_19] : memref<1x64xf32, #tpu.memory_space<vmem>>, vector<1x64xf32>
    %24 = vector.broadcast %23 : vector<1x64xf32> to vector<24x64xf32>
    %25 = arith.addf %22, %24 : vector<24x64xf32>
    %cst_20 = arith.constant 0.000000e+00 : f32
    %26 = vector.broadcast %cst_20 : f32 to vector<24x64xf32>
    %27 = arith.cmpf ogt, %25, %26 : vector<24x64xf32>
    %cst_21 = arith.constant 0.000000e+00 : f32
    %28 = vector.broadcast %cst_21 : f32 to vector<24x64xf32>
    %29 = arith.minimumf %25, %28 : vector<24x64xf32>
    %30 = math.exp %29 : vector<24x64xf32>
    %cst_22 = arith.constant 1.000000e+00 : f32
    %31 = vector.broadcast %cst_22 : f32 to vector<24x64xf32>
    %32 = arith.subf %30, %31 : vector<24x64xf32>
    %33 = arith.select %27, %25, %32 : vector<24x64xi1>, vector<24x64xf32>
    %34 = arith.truncf %33 : vector<24x64xf32> to vector<24x64xbf16>
    %c0_23 = arith.constant 0 : index
    %c0_24 = arith.constant 0 : index
    %35 = vector.load %arg8[%c0_23, %c0_24] : memref<64x128xbf16, #tpu.memory_space<vmem>>, vector<64x128xbf16>
    %cst_25 = arith.constant dense<0.000000e+00> : vector<24x128xf32>
    %36 = tpu.matmul %34, %35, %cst_25 {dimension_numbers = #tpu.dot_dimension_numbers<[1], [0], [0], [1], [0, 0, 1, 1], [], []>} : vector<24x64xbf16>, vector<64x128xbf16>, vector<24x128xf32> -> vector<24x128xf32>
    %c0_26 = arith.constant 0 : index
    %c0_27 = arith.constant 0 : index
    %37 = vector.load %arg9[%c0_26, %c0_27] : memref<1x128xf32, #tpu.memory_space<vmem>>, vector<1x128xf32>
    %38 = vector.broadcast %37 : vector<1x128xf32> to vector<24x128xf32>
    %39 = arith.addf %36, %38 : vector<24x128xf32>
    %c0_28 = arith.constant 0 : index
    %c0_29 = arith.constant 0 : index
    %40 = vector.load %arg11[%c0_28, %c0_29] : memref<24x128xf32, #tpu.memory_space<vmem>>, vector<24x128xf32>
    tpu.vector_store %arg11[%c0_28, %c0_29], %39 {strides = array<i32>} : memref<24x128xf32, #tpu.memory_space<vmem>>, vector<24x128xf32>,
    return
  }
  func.func @transform_0(%arg0: i32) -> (i32, i32) {
    %c0_i32 = arith.constant 0 : i32
    %c0_i32_0 = arith.constant 0 : i32
    return %arg0, %c0_i32 : i32, i32
  }
  func.func @transform_1(%arg0: i32) -> (i32, i32) {
    %c0_i32 = arith.constant 0 : i32
    %c0_i32_0 = arith.constant 0 : i32
    %c0_i32_1 = arith.constant 0 : i32
    return %c0_i32, %c0_i32_0 : i32, i32
  }
  func.func @transform_2(%arg0: i32) -> (i32, i32) {
    %c0_i32 = arith.constant 0 : i32
    %c0_i32_0 = arith.constant 0 : i32
    %c0_i32_1 = arith.constant 0 : i32
    return %c0_i32, %c0_i32_0 : i32, i32
  }
  func.func @transform_3(%arg0: i32) -> (i32, i32) {
    %c0_i32 = arith.constant 0 : i32
    %c0_i32_0 = arith.constant 0 : i32
    %c0_i32_1 = arith.constant 0 : i32
    return %c0_i32, %c0_i32_0 : i32, i32
  }
  func.func @transform_4(%arg0: i32) -> (i32, i32) {
    %c0_i32 = arith.constant 0 : i32
    %c0_i32_0 = arith.constant 0 : i32
    %c0_i32_1 = arith.constant 0 : i32
    return %c0_i32, %c0_i32_0 : i32, i32
  }
  func.func @transform_5(%arg0: i32) -> (i32, i32) {
    %c0_i32 = arith.constant 0 : i32
    %c0_i32_0 = arith.constant 0 : i32
    %c0_i32_1 = arith.constant 0 : i32
    return %c0_i32, %c0_i32_0 : i32, i32
  }
  func.func @transform_6(%arg0: i32) -> (i32, i32) {
    %c0_i32 = arith.constant 0 : i32
    %c0_i32_0 = arith.constant 0 : i32
    %c0_i32_1 = arith.constant 0 : i32
    return %c0_i32, %c0_i32_0 : i32, i32
  }
  func.func @transform_7(%arg0: i32) -> (i32, i32) {
    %c0_i32 = arith.constant 0 : i32
    %c0_i32_0 = arith.constant 0 : i32
    %c0_i32_1 = arith.constant 0 : i32
    return %c0_i32, %c0_i32_0 : i32, i32
  }
  func.func @transform_8(%arg0: i32) -> (i32, i32) {
    %c0_i32 = arith.constant 0 : i32
    %c0_i32_0 = arith.constant 0 : i32
    %c0_i32_1 = arith.constant 0 : i32
    return %c0_i32, %c0_i32_0 : i32, i32
  }
  func.func @transform_9(%arg0: i32) -> (i32, i32) {
    %c0_i32 = arith.constant 0 : i32
    %c0_i32_0 = arith.constant 0 : i32
    return %arg0, %c0_i32 : i32, i32
  }
  func.func @transform_10(%arg0: i32) -> (i32, i32) {
    %c0_i32 = arith.constant 0 : i32
    %c0_i32_0 = arith.constant 0 : i32
    return %arg0, %c0_i32 : i32, i32
  }
}

</mosaic_0001>

<llo_original>
// kernel: squeeze.1
$region0: #{squeeze.1}
  %s0 = inlined_call_operand.vmem [shape: f32[36], index: 0, kind: input, shape index: {}]
  %s1 = inlined_call_operand.vmem [shape: f32[2,3,6], index: 1, kind: output, shape index: {}]
  $region1: #{squeeze.1} parent=0
    #allocation0 [shape = 'u8[8192]{0}', space=vmem, size = 0x2000, scoped, tag = 'scoped mem for output reshape']
    #allocation1 [shape = 'u8[4096]{0}', space=vmem, size = 0x1000, scoped, tag = 'scoped mem for input reshape']
    %s3 = sshllo.u32 0, 1
    %v4 = vld [vmem:[%s0] sm:%s3]
    %5 = vst [vmem:[#allocation1] sm:%s3] %v4
    %v6 = vld [vmem:[#allocation1] sm:$0x1]
    %vm7 = vcmask 48128
    %8 = vst.msk [vmem:[#allocation0] sm:$0x1] %vm7, %v6
    %v9 = vld [vmem:[#allocation1] sm:$0x1]
    %10 = vrot.lane.b32.xlu0 %v9, 122
    %v11 = vpop.permute.xlu0 %10
    %vm12 = vcmask 48128
    %s13 = scalar_lea.vmem [#allocation0], 1
    %14 = vst.msk [vmem:[%s13] sm:$0x1] %vm12, %v11
    %v15 = vld [vmem:[#allocation1] sm:$0x1]
    %16 = vrot.lane.b32.xlu0 %v15, 116
    %v17 = vpop.permute.xlu0 %16
    %vm18 = vcmask 48128
    %s19 = scalar_lea.vmem [#allocation0], 2
    %20 = vst.msk [vmem:[%s19] sm:$0x1] %vm18, %v17
    %v21 = vld [vmem:[#allocation1] sm:$0x1]
    %22 = vrot.lane.b32.xlu0 %v21, 110
    %v23 = vpop.permute.xlu0 %22
    %vm24 = vcmask 48128
    %s25 = scalar_lea.vmem [#allocation0], 8
    %26 = vst.msk [vmem:[%s25] sm:$0x1] %vm24, %v23
    %v27 = vld [vmem:[#allocation1] sm:$0x1]
    %28 = vrot.lane.b32.xlu0 %v27, 104
    %v29 = vpop.permute.xlu0 %28
    %vm30 = vcmask 48128
    %s31 = scalar_lea.vmem [#allocation0], 9
    %32 = vst.msk [vmem:[%s31] sm:$0x1] %vm30, %v29
    %v33 = vld [vmem:[#allocation1] sm:$0x1]
    %34 = vrot.lane.b32.xlu0 %v33, 98
    %v35 = vpop.permute.xlu0 %34
    %vm36 = vcmask 48128
    %s37 = scalar_lea.vmem [#allocation0], 10
    %38 = vst.msk [vmem:[%s37] sm:$0x1] %vm36, %v35
    %s40 = sshllo.u32 0, 4
    %v42 = vld [vmem:[#allocation0] sm:%s40]
    %s43 = sshllo.u32 0, 4
    %44 = vst [vmem:[%s1] sm:%s43] %v42
    %s45 = scalar_lea.vmem [#allocation0], 8
    %v46 = vld [vmem:[%s45] sm:%s40]
    %s47 = sshllo.u32 0, 4
    %s48 = scalar_lea.vmem %s1, 4
    %49 = vst [vmem:[%s48] sm:%s47] %v46

// kernel: gmm_predictor.1
$region0: #{gmm_predictor.1}
  #allocation0 [shape = 'u32[]', space=smem, size = 0x4, offset = 0x4, fixed_abs, tag = 'smem constant byte address 0x4 - core index']
  #allocation1 [shape = 'u32[144,128]{1,0:T(1,128)}', space=vmem, size = 0x12000, scoped, tag = 'internal scratch']
  %s0 = inlined_call_operand.vmem [shape: bf16[48,256], index: 0, kind: input, shape index: {}]
  %s1 = inlined_call_operand.vmem [shape: bf16[256,512], index: 1, kind: input, shape index: {}]
  %s2 = inlined_call_operand.vmem [shape: f32[1,512], index: 2, kind: input, shape index: {}]
  %s3 = inlined_call_operand.vmem [shape: bf16[512,320], index: 3, kind: input, shape index: {}]
  %s4 = inlined_call_operand.vmem [shape: f32[1,320], index: 4, kind: input, shape index: {}]
  %s5 = inlined_call_operand.vmem [shape: bf16[256,64], index: 5, kind: input, shape index: {}]
  %s6 = inlined_call_operand.vmem [shape: f32[1,64], index: 6, kind: input, shape index: {}]
  %s7 = inlined_call_operand.vmem [shape: bf16[64,128], index: 7, kind: input, shape index: {}]
  %s8 = inlined_call_operand.vmem [shape: f32[1,128], index: 8, kind: input, shape index: {}]
  %s9 = inlined_call_operand.vmem [shape: f32[48,320], index: 9, kind: output, shape index: {0}]
  %s10 = inlined_call_operand.vmem [shape: f32[48,128], index: 10, kind: output, shape index: {1}]
  %11 = xla_tuple %s9, %s10
  %s12 = sld [smem:[#allocation0]]
  $region77: #{gmm_predictor.1} parent=0
    _
  %s14 = ssub.s32 1, %s12
  %s15 = scalar_select 0, %s14, %s12
  loop: start=0, step=1, limit=4
  $region2: #{gmm_predictor.1} parent=0 // loop_pre_header
    _
  $region3: #{gmm_predictor.1} parent=0 // loop_header
    %s17 = sphi 0, %s21
    %p18 = scmp.ge.s32.totalorder %s17, 4
    %s27 = sphi 0, %s29
    %s30 = sphi 0, %s27
    %s31 = sphi 0, %s30
    %s47 = sphi 0, %s31
    %s51 = sphi 0, %s51
    %s53 = sphi 0, %s51
    %s54 = sphi 0, %s53
    %s68 = sphi 0, %s54
    %s72 = sphi 0, %s72
    %s74 = sphi 0, %s72
    %s75 = sphi 0, %s74
    %s89 = sphi 0, %s75
    %s93 = sphi 0, %s93
    %s95 = sphi 0, %s93
    %s96 = sphi 0, %s95
    %s110 = sphi 0, %s96
    %s114 = sphi 0, %s114
    %s116 = sphi 0, %s114
    %s117 = sphi 0, %s116
    %s131 = sphi 0, %s117
    %s135 = sphi 0, %s135
    %s137 = sphi 0, %s135
    %s138 = sphi 0, %s137
    %s152 = sphi 0, %s138
    %s156 = sphi 0, %s156
    %s158 = sphi 0, %s156
    %s159 = sphi 0, %s158
    %s173 = sphi 0, %s159
    %s177 = sphi 0, %s177
    %s179 = sphi 0, %s177
    %s180 = sphi 0, %s179
    %s194 = sphi 0, %s180
    %s198 = sphi 0, %s198
    %s200 = sphi 0, %s198
    %s201 = sphi 0, %s200
    %s215 = sphi 0, %s201
    %s221 = sphi 0, %s223
    %s224 = sphi 0, %s221
    %s225 = sphi 0, %s224
    %s241 = sphi 0, %s225
    %s247 = sphi 0, %s249
    %s250 = sphi 0, %s247
    %s251 = sphi 0, %s250
    %s267 = sphi 0, %s251
  $region4: #{gmm_predictor.1} parent=0 // loop_header_branch
    %20 = sbr.rel (%p18) target = $region8
  $region5: #{gmm_predictor.1} parent=0 // loop_body
    %s22 = ssub.s32 %s17, 1
    %s23 = ssub.s32 %s17, 2
    %s24 = sadd.s32 %s17, 1
    %s25 = ssub.s32 %s17, %s24
    %p26 = scmp.eq.s32.totalorder %s25, 0
    %s28 = sadd.s32 %s27, 1
    %s29 = scalar_select %p26, %s27, %s28
    %p32 = pneg %p26
    %p33 = scmp.eq.s32.totalorder %s17, 1
    %p34 = por %p32, %p33
    %p35 = scmp.ne.s32.totalorder %s27, %s30
    %p36 = scmp.eq.s32.totalorder %s17, 0
    %p37 = por %p35, %p36
    %p38 = scmp.ne.s32.totalorder %s27, %s30
    %p39 = scmp.eq.s32.totalorder %s22, 1
    %p40 = por %p38, %p39
    %p41 = scmp.ne.s32.totalorder %s30, %s31
    %p42 = scmp.eq.s32.totalorder %s22, 0
    %p43 = por %p41, %p42
    %p44 = scmp.ne.s32.totalorder %s30, %s31
    %p45 = scmp.eq.s32.totalorder %s23, 1
    %p46 = por %p44, %p45
    %p48 = scmp.ne.s32.totalorder %s31, %s47
    %p49 = scmp.eq.s32.totalorder %s23, 0
    %p50 = por %p48, %p49
    %s52 = sadd.s32 %s51, 1
    %p55 = scmp.eq.s32.totalorder %s17, 1
    %p56 = scmp.ne.s32.totalorder %s51, %s53
    %p57 = scmp.eq.s32.totalorder %s17, 0
    %p58 = por %p56, %p57
    %p59 = scmp.ne.s32.totalorder %s51, %s53
    %p60 = scmp.eq.s32.totalorder %s22, 1
    %p61 = por %p59, %p60
    %p62 = scmp.ne.s32.totalorder %s53, %s54
    %p63 = scmp.eq.s32.totalorder %s22, 0
    %p64 = por %p62, %p63
    %p65 = scmp.ne.s32.totalorder %s53, %s54
    %p66 = scmp.eq.s32.totalorder %s23, 1
    %p67 = por %p65, %p66
    %p69 = scmp.ne.s32.totalorder %s54, %s68
    %p70 = scmp.eq.s32.totalorder %s23, 0
    %p71 = por %p69, %p70
    %s73 = sadd.s32 %s72, 1
    %p76 = scmp.eq.s32.totalorder %s17, 1
    %p77 = scmp.ne.s32.totalorder %s72, %s74
    %p78 = scmp.eq.s32.totalorder %s17, 0
    %p79 = por %p77, %p78
    %p80 = scmp.ne.s32.totalorder %s72, %s74
    %p81 = scmp.eq.s32.totalorder %s22, 1
    %p82 = por %p80, %p81
    %p83 = scmp.ne.s32.totalorder %s74, %s75
    %p84 = scmp.eq.s32.totalorder %s22, 0
    %p85 = por %p83, %p84
    %p86 = scmp.ne.s32.totalorder %s74, %s75
    %p87 = scmp.eq.s32.totalorder %s23, 1
    %p88 = por %p86, %p87
    %p90 = scmp.ne.s32.totalorder %s75, %s89
    %p91 = scmp.eq.s32.totalorder %s23, 0
    %p92 = por %p90, %p91
    %s94 = sadd.s32 %s93, 1
    %p97 = scmp.eq.s32.totalorder %s17, 1
    %p98 = scmp.ne.s32.totalorder %s93, %s95
    %p99 = scmp.eq.s32.totalorder %s17, 0
    %p100 = por %p98, %p99
    %p101 = scmp.ne.s32.totalorder %s93, %s95
    %p102 = scmp.eq.s32.totalorder %s22, 1
    %p103 = por %p101, %p102
    %p104 = scmp.ne.s32.totalorder %s95, %s96
    %p105 = scmp.eq.s32.totalorder %s22, 0
    %p106 = por %p104, %p105
    %p107 = scmp.ne.s32.totalorder %s95, %s96
    %p108 = scmp.eq.s32.totalorder %s23, 1
    %p109 = por %p107, %p108
    %p111 = scmp.ne.s32.totalorder %s96, %s110
    %p112 = scmp.eq.s32.totalorder %s23, 0
    %p113 = por %p111, %p112
    %s115 = sadd.s32 %s114, 1
    %p118 = scmp.eq.s32.totalorder %s17, 1
    %p119 = scmp.ne.s32.totalorder %s114, %s116
    %p120 = scmp.eq.s32.totalorder %s17, 0
    %p121 = por %p119, %p120
    %p122 = scmp.ne.s32.totalorder %s114, %s116
    %p123 = scmp.eq.s32.totalorder %s22, 1
    %p124 = por %p122, %p123
    %p125 = scmp.ne.s32.totalorder %s116, %s117
    %p126 = scmp.eq.s32.totalorder %s22, 0
    %p127 = por %p125, %p126
    %p128 = scmp.ne.s32.totalorder %s116, %s117
    %p129 = scmp.eq.s32.totalorder %s23, 1
    %p130 = por %p128, %p129
    %p132 = scmp.ne.s32.totalorder %s117, %s131
    %p133 = scmp.eq.s32.totalorder %s23, 0
    %p134 = por %p132, %p133
    %s136 = sadd.s32 %s135, 1
    %p139 = scmp.eq.s32.totalorder %s17, 1
    %p140 = scmp.ne.s32.totalorder %s135, %s137
    %p141 = scmp.eq.s32.totalorder %s17, 0
    %p142 = por %p140, %p141
    %p143 = scmp.ne.s32.totalorder %s135, %s137
    %p144 = scmp.eq.s32.totalorder %s22, 1
    %p145 = por %p143, %p144
    %p146 = scmp.ne.s32.totalorder %s137, %s138
    %p147 = scmp.eq.s32.totalorder %s22, 0
    %p148 = por %p146, %p147
    %p149 = scmp.ne.s32.totalorder %s137, %s138
    %p150 = scmp.eq.s32.totalorder %s23, 1
    %p151 = por %p149, %p150
    %p153 = scmp.ne.s32.totalorder %s138, %s152
    %p154 = scmp.eq.s32.totalorder %s23, 0
    %p155 = por %p153, %p154
    %s157 = sadd.s32 %s156, 1
    %p160 = scmp.eq.s32.totalorder %s17, 1
    %p161 = scmp.ne.s32.totalorder %s156, %s158
    %p162 = scmp.eq.s32.totalorder %s17, 0
    %p163 = por %p161, %p162
    %p164 = scmp.ne.s32.totalorder %s156, %s158
    %p165 = scmp.eq.s32.totalorder %s22, 1
    %p166 = por %p164, %p165
    %p167 = scmp.ne.s32.totalorder %s158, %s159
    %p168 = scmp.eq.s32.totalorder %s22, 0
    %p169 = por %p167, %p168
    %p170 = scmp.ne.s32.totalorder %s158, %s159
    %p171 = scmp.eq.s32.totalorder %s23, 1
    %p172 = por %p170, %p171
    %p174 = scmp.ne.s32.totalorder %s159, %s173
    %p175 = scmp.eq.s32.totalorder %s23, 0
    %p176 = por %p174, %p175
    %s178 = sadd.s32 %s177, 1
    %p181 = scmp.eq.s32.totalorder %s17, 1
    %p182 = scmp.ne.s32.totalorder %s177, %s179
    %p183 = scmp.eq.s32.totalorder %s17, 0
    %p184 = por %p182, %p183
    %p185 = scmp.ne.s32.totalorder %s177, %s179
    %p186 = scmp.eq.s32.totalorder %s22, 1
    %p187 = por %p185, %p186
    %p188 = scmp.ne.s32.totalorder %s179, %s180
    %p189 = scmp.eq.s32.totalorder %s22, 0
    %p190 = por %p188, %p189
    %p191 = scmp.ne.s32.totalorder %s179, %s180
    %p192 = scmp.eq.s32.totalorder %s23, 1
    %p193 = por %p191, %p192
    %p195 = scmp.ne.s32.totalorder %s180, %s194
    %p196 = scmp.eq.s32.totalorder %s23, 0
    %p197 = por %p195, %p196
    %s199 = sadd.s32 %s198, 1
    %p202 = scmp.eq.s32.totalorder %s17, 1
    %p203 = scmp.ne.s32.totalorder %s198, %s200
    %p204 = scmp.eq.s32.totalorder %s17, 0
    %p205 = por %p203, %p204
    %p206 = scmp.ne.s32.totalorder %s198, %s200
    %p207 = scmp.eq.s32.totalorder %s22, 1
    %p208 = por %p206, %p207
    %p209 = scmp.ne.s32.totalorder %s200, %s201
    %p210 = scmp.eq.s32.totalorder %s22, 0
    %p211 = por %p209, %p210
    %p212 = scmp.ne.s32.totalorder %s200, %s201
    %p213 = scmp.eq.s32.totalorder %s23, 1
    %p214 = por %p212, %p213
    %p216 = scmp.ne.s32.totalorder %s201, %s215
    %p217 = scmp.eq.s32.totalorder %s23, 0
    %p218 = por %p216, %p217
    %s219 = ssub.s32 %s17, %s24
    %p220 = scmp.eq.s32.totalorder %s219, 0
    %s222 = sadd.s32 %s221, 1
    %s223 = scalar_select %p220, %s221, %s222
    %p226 = pneg %p220
    %p227 = scmp.eq.s32.totalorder %s17, 1
    %p228 = por %p226, %p227
    %p229 = scmp.ne.s32.totalorder %s221, %s224
    %p230 = scmp.eq.s32.totalorder %s17, 0
    %p231 = por %p229, %p230
    %p232 = scmp.ne.s32.totalorder %s221, %s224
    %p233 = scmp.eq.s32.totalorder %s22, 1
    %p234 = por %p232, %p233
    %p235 = scmp.ne.s32.totalorder %s224, %s225
    %p236 = scmp.eq.s32.totalorder %s22, 0
    %p237 = por %p235, %p236
    %p238 = scmp.ne.s32.totalorder %s224, %s225
    %p239 = scmp.eq.s32.totalorder %s23, 1
    %p240 = por %p238, %p239
    %p242 = scmp.ne.s32.totalorder %s225, %s241
    %p243 = scmp.eq.s32.totalorder %s23, 0
    %p244 = por %p242, %p243
    %s245 = ssub.s32 %s17, %s24
    %p246 = scmp.eq.s32.totalorder %s245, 0
    %s248 = sadd.s32 %s247, 1
    %s249 = scalar_select %p246, %s247, %s248
    %p252 = pneg %p246
    %p253 = scmp.eq.s32.totalorder %s17, 1
    %p254 = por %p252, %p253
    %p255 = scmp.ne.s32.totalorder %s247, %s250
    %p256 = scmp.eq.s32.totalorder %s17, 0
    %p257 = por %p255, %p256
    %p258 = scmp.ne.s32.totalorder %s247, %s250
    %p259 = scmp.eq.s32.totalorder %s22, 1
    %p260 = por %p258, %p259
    %p261 = scmp.ne.s32.totalorder %s250, %s251
    %p262 = scmp.eq.s32.totalorder %s22, 0
    %p263 = por %p261, %p262
    %p264 = scmp.ne.s32.totalorder %s250, %s251
    %p265 = scmp.eq.s32.totalorder %s23, 1
    %p266 = por %p264, %p265
    %p268 = scmp.ne.s32.totalorder %s251, %s267
    %p269 = scmp.eq.s32.totalorder %s23, 0
    %p270 = por %p268, %p269
    %p271 = scmp.le.s32.totalorder 1, %s17
    %p272 = scmp.lt.s32.totalorder %s17, 3
    %p273 = pnand %p271, %p272
    %p274 = pneg %p273
    // Predicated region
    $region9: #{gmm_predictor.1} parent=5 // pred_check
      _
    $region10: #{gmm_predictor.1} parent=5 // pred_check_branch
      %276 = sbr.rel (%p273) target = $region12
    $region11: #{gmm_predictor.1} parent=5 // pred_region
      %s277 = ssub.s32 %s17, 1
      // Predicated region
      $region13: #{gmm_predictor.1} parent=11 // pred_check
        %p278 = pneg %p64
      $region14: #{gmm_predictor.1} parent=11 // pred_check_branch
        %280 = sbr.rel (%p278) target = $region16
      $region15: #{gmm_predictor.1} parent=11 // pred_region
        _
      $region16: #{gmm_predictor.1} parent=11 // pred_fallthru
        _
      // Predicated region
      $region17: #{gmm_predictor.1} parent=11 // pred_check
        %p281 = pneg %p85
      $region18: #{gmm_predictor.1} parent=11 // pred_check_branch
        %283 = sbr.rel (%p281) target = $region20
      $region19: #{gmm_predictor.1} parent=11 // pred_region
        _
      $region20: #{gmm_predictor.1} parent=11 // pred_fallthru
        _
      // Predicated region
      $region21: #{gmm_predictor.1} parent=11 // pred_check
        %p284 = pneg %p106
      $region22: #{gmm_predictor.1} parent=11 // pred_check_branch
        %286 = sbr.rel (%p284) target = $region24
      $region23: #{gmm_predictor.1} parent=11 // pred_region
        _
      $region24: #{gmm_predictor.1} parent=11 // pred_fallthru
        _
      // Predicated region
      $region25: #{gmm_predictor.1} parent=11 // pred_check
        %p287 = pneg %p127
      $region26: #{gmm_predictor.1} parent=11 // pred_check_branch
        %289 = sbr.rel (%p287) target = $region28
      $region27: #{gmm_predictor.1} parent=11 // pred_region
        _
      $region28: #{gmm_predictor.1} parent=11 // pred_fallthru
        _
      // Predicated region
      $region29: #{gmm_predictor.1} parent=11 // pred_check
        %p290 = pneg %p148
      $region30: #{gmm_predictor.1} parent=11 // pred_check_branch
        %292 = sbr.rel (%p290) target = $region32
      $region31: #{gmm_predictor.1} parent=11 // pred_region
        _
      $region32: #{gmm_predictor.1} parent=11 // pred_fallthru
        _
      // Predicated region
      $region33: #{gmm_predictor.1} parent=11 // pred_check
        %p293 = pneg %p169
      $region34: #{gmm_predictor.1} parent=11 // pred_check_branch
        %295 = sbr.rel (%p293) target = $region36
      $region35: #{gmm_predictor.1} parent=11 // pred_region
        _
      $region36: #{gmm_predictor.1} parent=11 // pred_fallthru
        _
      // Predicated region
      $region37: #{gmm_predictor.1} parent=11 // pred_check
        %p296 = pneg %p190
      $region38: #{gmm_predictor.1} parent=11 // pred_check_branch
        %298 = sbr.rel (%p296) target = $region40
      $region39: #{gmm_predictor.1} parent=11 // pred_region
        _
      $region40: #{gmm_predictor.1} parent=11 // pred_fallthru
        _
      // Predicated region
      $region41: #{gmm_predictor.1} parent=11 // pred_check
        %p299 = pneg %p211
      $region42: #{gmm_predictor.1} parent=11 // pred_check_branch
        %301 = sbr.rel (%p299) target = $region44
      $region43: #{gmm_predictor.1} parent=11 // pred_region
        _
      $region44: #{gmm_predictor.1} parent=11 // pred_fallthru
        _
    $region12: #{gmm_predictor.1} parent=5 // pred_fallthru
      _
    %p302 = scmp.lt.s32.totalorder %s17, 2
    // Predicated region
    $region45: #{gmm_predictor.1} parent=5 // pred_check
      %p303 = pneg %p302
    $region46: #{gmm_predictor.1} parent=5 // pred_check_branch
      %305 = sbr.rel (%p303) target = $region48
    $region47: #{gmm_predictor.1} parent=5 // pred_region
      // Predicated region
      $region49: #{gmm_predictor.1} parent=47 // pred_check
        %p306 = pneg %p37
      $region50: #{gmm_predictor.1} parent=47 // pred_check_branch
        %308 = sbr.rel (%p306) target = $region52
      $region51: #{gmm_predictor.1} parent=47 // pred_region
        %s309 = smul.u32 3, %s17
        %p310 = scmp.lt.s32.totalorder %s309, 5
        %s311 = scalar_select %p310, %s309, 5
        %s312 = smul.addr %s311, 2
        %s313 = smul.addr %s312, 4
        %s314 = scalar_lea.vmem %s0, %s313
        %s315 = smul.u32 3, %s17
      $region52: #{gmm_predictor.1} parent=47 // pred_fallthru
        _
    $region48: #{gmm_predictor.1} parent=5 // pred_fallthru
      _
    %p316 = scmp.le.s32.totalorder 1, %s17
    %p317 = scmp.lt.s32.totalorder %s17, 3
    %p318 = pnand %p316, %p317
    %p319 = pneg %p318
    // Predicated region
    $region53: #{gmm_predictor.1} parent=5 // pred_check
      _
    $region54: #{gmm_predictor.1} parent=5 // pred_check_branch
      %321 = sbr.rel (%p318) target = $region56
    $region55: #{gmm_predictor.1} parent=5 // pred_region
      %s322 = ssub.s32 %s17, 1
      %s323 = smul.u32 3, %s22
      %p324 = scmp.lt.s32.totalorder %s323, 5
      %s325 = scalar_select %p324, %s323, 5
      %s326 = smul.addr %s325, 2
      %s327 = smul.addr %s326, 4
      %s328 = scalar_lea.vmem %s0, %s327
      %p329 = pneg %p43
      %p330 = pneg %p40
      %p331 = pneg %p64
      %p332 = pneg %p61
      %p333 = pneg %p85
      %p334 = pneg %p82
      %p335 = pneg %p106
      %p336 = pneg %p103
      %p337 = pneg %p127
      %p338 = pneg %p124
      %p339 = pneg %p148
      %p340 = pneg %p145
      %p341 = pneg %p169
      %p342 = pneg %p166
      %p343 = pneg %p190
      %p344 = pneg %p187
      %p345 = pneg %p211
      %p346 = pneg %p208
      %p347 = pneg %p237
      %p348 = pneg %p234
      %s349 = smul.u32 3, %s22
      %p350 = scmp.lt.s32.totalorder %s349, 5
      %s351 = scalar_select %p350, %s349, 5
      %s352 = smul.addr %s351, 3
      %s353 = smul.addr %s352, 8
      %s354 = scalar_lea.vmem %s9, %s353
      %p355 = pneg %p263
      %p356 = pneg %p260
      %s357 = smul.u32 3, %s22
      %p358 = scmp.lt.s32.totalorder %s357, 5
      %s359 = scalar_select %p358, %s357, 5
      %s360 = smul.addr %s359, 8
      %s361 = scalar_lea.vmem %s10, %s360
      %s362 = smul.u32 3, %s22
      %p363 = scmp.lt.s32.totalorder %s362, 5
      %s364 = scalar_select %p363, %s362, 5
      %s365 = smul.addr %s364, 2
      %s366 = smul.addr %s365, 4
      %s367 = scalar_lea.vmem %s0, %s366
      %s368 = smul.u32 3, %s22
      %s369 = smul.u32 3, %s22
      %p370 = scmp.lt.s32.totalorder %s369, 5
      %s371 = scalar_select %p370, %s369, 5
      %s372 = smul.addr %s371, 3
      %s373 = smul.addr %s372, 8
      %s374 = scalar_lea.vmem %s9, %s373
      %s375 = smul.u32 3, %s22
      %s376 = smul.u32 3, %s22
      %p377 = scmp.lt.s32.totalorder %s376, 5
      %s378 = scalar_select %p377, %s376, 5
      %s379 = smul.addr %s378, 8
      %s380 = scalar_lea.vmem %s10, %s379
      %s381 = smul.u32 3, %s22
      %v383 = vld [vmem:[%s367] sm:$0xff]
      %v384 = vld [vmem:[%s367 + $0x8] sm:$0xff]
      %v385 = vld [vmem:[%s367 + $0x10] sm:$0xff]
      %v386 = vld [vmem:[%s1] sm:$0xff]
      %v387 = vld [vmem:[%s1 + $0x8] sm:$0xff]
      %v388 = vld [vmem:[%s1 + $0x10] sm:$0xff]
      %v389 = vld [vmem:[%s1 + $0x18] sm:$0xff]
      %v390 = vld [vmem:[%s1 + $0x20] sm:$0xff]
      %v391 = vld [vmem:[%s1 + $0x28] sm:$0xff]
      %v392 = vld [vmem:[%s1 + $0x30] sm:$0xff]
      %v393 = vld [vmem:[%s1 + $0x38] sm:$0xff]
      %v394 = vld [vmem:[%s1 + $0x40] sm:$0xff]
      %v395 = vld [vmem:[%s1 + $0x48] sm:$0xff]
      %v396 = vld [vmem:[%s1 + $0x50] sm:$0xff]
      %v397 = vld [vmem:[%s1 + $0x58] sm:$0xff]
      %v398 = vld [vmem:[%s1 + $0x60] sm:$0xff]
      %v399 = vld [vmem:[%s1 + $0x68] sm:$0xff]
      %v400 = vld [vmem:[%s1 + $0x70] sm:$0xff]
      %v401 = vld [vmem:[%s1 + $0x78] sm:$0xff]
      %v402 = vld [vmem:[%s1 + $0x80] sm:$0xff]
      %v403 = vld [vmem:[%s1 + $0x88] sm:$0xff]
      %v404 = vld [vmem:[%s1 + $0x90] sm:$0xff]
      %v405 = vld [vmem:[%s1 + $0x98] sm:$0xff]
      %v406 = vld [vmem:[%s1 + $0xa0] sm:$0xff]
      %v407 = vld [vmem:[%s1 + $0xa8] sm:$0xff]
      %v408 = vld [vmem:[%s1 + $0xb0] sm:$0xff]
      %v409 = vld [vmem:[%s1 + $0xb8] sm:$0xff]
      %v410 = vld [vmem:[%s1 + $0xc0] sm:$0xff]
      %v411 = vld [vmem:[%s1 + $0xc8] sm:$0xff]
      %v412 = vld [vmem:[%s1 + $0xd0] sm:$0xff]
      %v413 = vld [vmem:[%s1 + $0xd8] sm:$0xff]
      %v414 = vld [vmem:[%s1 + $0xe0] sm:$0xff]
      %v415 = vld [vmem:[%s1 + $0xe8] sm:$0xff]
      %v416 = vld [vmem:[%s1 + $0xf0] sm:$0xff]
      %v417 = vld [vmem:[%s1 + $0xf8] sm:$0xff]
      %v418 = vld [vmem:[%s1 + $0x100] sm:$0xff]
      %v419 = vld [vmem:[%s1 + $0x108] sm:$0xff]
      %v420 = vld [vmem:[%s1 + $0x110] sm:$0xff]
      %v421 = vld [vmem:[%s1 + $0x118] sm:$0xff]
      %v422 = vld [vmem:[%s1 + $0x120] sm:$0xff]
      %v423 = vld [vmem:[%s1 + $0x128] sm:$0xff]
      %v424 = vld [vmem:[%s1 + $0x130] sm:$0xff]
      %v425 = vld [vmem:[%s1 + $0x138] sm:$0xff]
      %v426 = vld [vmem:[%s1 + $0x140] sm:$0xff]
      %v427 = vld [vmem:[%s1 + $0x148] sm:$0xff]
      %v428 = vld [vmem:[%s1 + $0x150] sm:$0xff]
      %v429 = vld [vmem:[%s1 + $0x158] sm:$0xff]
      %v430 = vld [vmem:[%s1 + $0x160] sm:$0xff]
      %v431 = vld [vmem:[%s1 + $0x168] sm:$0xff]
      %v432 = vld [vmem:[%s1 + $0x170] sm:$0xff]
      %v433 = vld [vmem:[%s1 + $0x178] sm:$0xff]
      %v434 = vld [vmem:[%s1 + $0x180] sm:$0xff]
      %v435 = vld [vmem:[%s1 + $0x188] sm:$0xff]
      %v436 = vld [vmem:[%s1 + $0x190] sm:$0xff]
      %v437 = vld [vmem:[%s1 + $0x198] sm:$0xff]
      %v438 = vld [vmem:[%s1 + $0x1a0] sm:$0xff]
      %v439 = vld [vmem:[%s1 + $0x1a8] sm:$0xff]
      %v440 = vld [vmem:[%s1 + $0x1b0] sm:$0xff]
      %v441 = vld [vmem:[%s1 + $0x1b8] sm:$0xff]
      %v442 = vld [vmem:[%s1 + $0x1c0] sm:$0xff]
      %v443 = vld [vmem:[%s1 + $0x1c8] sm:$0xff]
      %v444 = vld [vmem:[%s1 + $0x1d0] sm:$0xff]
      %v445 = vld [vmem:[%s1 + $0x1d8] sm:$0xff]
      %v446 = vld [vmem:[%s1 + $0x1e0] sm:$0xff]
      %v447 = vld [vmem:[%s1 + $0x1e8] sm:$0xff]
      %v448 = vld [vmem:[%s1 + $0x1f0] sm:$0xff]
      %v449 = vld [vmem:[%s1 + $0x1f8] sm:$0xff]
      %v450 = vld [vmem:[%s2] sm:$0xf]
      %v452 = vlaneseq
      %v453 = vshrl.u32 %v452, 7
      %v454 = vsub.s32 0, %v453
      %v455 = vrot.slane %v450, %v454
      %v456 = vlaneseq
      %v457 = vshrl.u32 %v456, 7
      %v458 = vsub.s32 1, %v457
      %v459 = vrot.slane %v450, %v458
      %v460 = vlaneseq
      %v461 = vshrl.u32 %v460, 7
      %v462 = vsub.s32 2, %v461
      %v463 = vrot.slane %v450, %v462
      %v464 = vlaneseq
      %v465 = vshrl.u32 %v464, 7
      %v466 = vsub.s32 3, %v465
      %v467 = vrot.slane %v450, %v466
      %v475 = vunpack.c.l.b16 %v383
      %v476 = vunpack.c.h.b16 %v383
      %v477 = vunpack.c.l.b16 %v384
      %v478 = vunpack.c.h.b16 %v384
      %v479 = vunpack.c.l.b16 %v385
      %v480 = vunpack.c.h.b16 %v385
      %v481 = vpack.c.b16 %v477, %v475
      %v482 = vpack.c.b16 %v478, %v476
      %v483 = vpack.c.b16 %v479, %v479
      %v484 = vpack.c.b16 %v480, %v480
      %v553 = vunpack.c.l.b16 %v386
      %v554 = vunpack.c.h.b16 %v386
      %v555 = vunpack.c.l.b16 %v387
      %v556 = vunpack.c.h.b16 %v387
      %v557 = vunpack.c.l.b16 %v388
      %v558 = vunpack.c.h.b16 %v388
      %v559 = vunpack.c.l.b16 %v389
      %v560 = vunpack.c.h.b16 %v389
      %v561 = vunpack.c.l.b16 %v390
      %v562 = vunpack.c.h.b16 %v390
      %v563 = vunpack.c.l.b16 %v391
      %v564 = vunpack.c.h.b16 %v391
      %v565 = vunpack.c.l.b16 %v392
      %v566 = vunpack.c.h.b16 %v392
      %v567 = vunpack.c.l.b16 %v393
      %v568 = vunpack.c.h.b16 %v393
      %v569 = vunpack.c.l.b16 %v394
      %v570 = vunpack.c.h.b16 %v394
      %v571 = vunpack.c.l.b16 %v395
      %v572 = vunpack.c.h.b16 %v395
      %v573 = vunpack.c.l.b16 %v396
      %v574 = vunpack.c.h.b16 %v396
      %v575 = vunpack.c.l.b16 %v397
      %v576 = vunpack.c.h.b16 %v397
      %v577 = vunpack.c.l.b16 %v398
      %v578 = vunpack.c.h.b16 %v398
      %v579 = vunpack.c.l.b16 %v399
      %v580 = vunpack.c.h.b16 %v399
      %v581 = vunpack.c.l.b16 %v400
      %v582 = vunpack.c.h.b16 %v400
      %v583 = vunpack.c.l.b16 %v401
      %v584 = vunpack.c.h.b16 %v401
      %v585 = vunpack.c.l.b16 %v402
      %v586 = vunpack.c.h.b16 %v402
      %v587 = vunpack.c.l.b16 %v403
      %v588 = vunpack.c.h.b16 %v403
      %v589 = vunpack.c.l.b16 %v404
      %v590 = vunpack.c.h.b16 %v404
      %v591 = vunpack.c.l.b16 %v405
      %v592 = vunpack.c.h.b16 %v405
      %v593 = vunpack.c.l.b16 %v406
      %v594 = vunpack.c.h.b16 %v406
      %v595 = vunpack.c.l.b16 %v407
      %v596 = vunpack.c.h.b16 %v407
      %v597 = vunpack.c.l.b16 %v408
      %v598 = vunpack.c.h.b16 %v408
      %v599 = vunpack.c.l.b16 %v409
      %v600 = vunpack.c.h.b16 %v409
      %v601 = vunpack.c.l.b16 %v410
      %v602 = vunpack.c.h.b16 %v410
      %v603 = vunpack.c.l.b16 %v411
      %v604 = vunpack.c.h.b16 %v411
      %v605 = vunpack.c.l.b16 %v412
      %v606 = vunpack.c.h.b16 %v412
      %v607 = vunpack.c.l.b16 %v413
      %v608 = vunpack.c.h.b16 %v413
      %v609 = vunpack.c.l.b16 %v414
      %v610 = vunpack.c.h.b16 %v414
      %v611 = vunpack.c.l.b16 %v415
      %v612 = vunpack.c.h.b16 %v415
      %v613 = vunpack.c.l.b16 %v416
      %v614 = vunpack.c.h.b16 %v416
      %v615 = vunpack.c.l.b16 %v417
      %v616 = vunpack.c.h.b16 %v417
      %v617 = vunpack.c.l.b16 %v418
      %v618 = vunpack.c.h.b16 %v418
      %v619 = vunpack.c.l.b16 %v419
      %v620 = vunpack.c.h.b16 %v419
      %v621 = vunpack.c.l.b16 %v420
      %v622 = vunpack.c.h.b16 %v420
      %v623 = vunpack.c.l.b16 %v421
      %v624 = vunpack.c.h.b16 %v421
      %v625 = vunpack.c.l.b16 %v422
      %v626 = vunpack.c.h.b16 %v422
      %v627 = vunpack.c.l.b16 %v423
      %v628 = vunpack.c.h.b16 %v423
      %v629 = vunpack.c.l.b16 %v424
      %v630 = vunpack.c.h.b16 %v424
      %v631 = vunpack.c.l.b16 %v425
      %v632 = vunpack.c.h.b16 %v425
      %v633 = vunpack.c.l.b16 %v426
      %v634 = vunpack.c.h.b16 %v426
      %v635 = vunpack.c.l.b16 %v427
      %v636 = vunpack.c.h.b16 %v427
      %v637 = vunpack.c.l.b16 %v428
      %v638 = vunpack.c.h.b16 %v428
      %v639 = vunpack.c.l.b16 %v429
      %v640 = vunpack.c.h.b16 %v429
      %v641 = vunpack.c.l.b16 %v430
      %v642 = vunpack.c.h.b16 %v430
      %v643 = vunpack.c.l.b16 %v431
      %v644 = vunpack.c.h.b16 %v431
      %v645 = vunpack.c.l.b16 %v432
      %v646 = vunpack.c.h.b16 %v432
      %v647 = vunpack.c.l.b16 %v433
      %v648 = vunpack.c.h.b16 %v433
      %v649 = vunpack.c.l.b16 %v434
      %v650 = vunpack.c.h.b16 %v434
      %v651 = vunpack.c.l.b16 %v435
      %v652 = vunpack.c.h.b16 %v435
      %v653 = vunpack.c.l.b16 %v436
      %v654 = vunpack.c.h.b16 %v436
      %v655 = vunpack.c.l.b16 %v437
      %v656 = vunpack.c.h.b16 %v437
      %v657 = vunpack.c.l.b16 %v438
      %v658 = vunpack.c.h.b16 %v438
      %v659 = vunpack.c.l.b16 %v439
      %v660 = vunpack.c.h.b16 %v439
      %v661 = vunpack.c.l.b16 %v440
      %v662 = vunpack.c.h.b16 %v440
      %v663 = vunpack.c.l.b16 %v441
      %v664 = vunpack.c.h.b16 %v441
      %v665 = vunpack.c.l.b16 %v442
      %v666 = vunpack.c.h.b16 %v442
      %v667 = vunpack.c.l.b16 %v443
      %v668 = vunpack.c.h.b16 %v443
      %v669 = vunpack.c.l.b16 %v444
      %v670 = vunpack.c.h.b16 %v444
      %v671 = vunpack.c.l.b16 %v445
      %v672 = vunpack.c.h.b16 %v445
      %v673 = vunpack.c.l.b16 %v446
      %v674 = vunpack.c.h.b16 %v446
      %v675 = vunpack.c.l.b16 %v447
      %v676 = vunpack.c.h.b16 %v447
      %v677 = vunpack.c.l.b16 %v448
      %v678 = vunpack.c.h.b16 %v448
      %v679 = vunpack.c.l.b16 %v449
      %v680 = vunpack.c.h.b16 %v449
      %v681 = vpack.c.b16 %v557, %v553
      %v682 = vpack.c.b16 %v558, %v554
      %v683 = vpack.c.b16 %v559, %v555
      %v684 = vpack.c.b16 %v560, %v556
      %v685 = vpack.c.b16 %v565, %v561
      %v686 = vpack.c.b16 %v566, %v562
      %v687 = vpack.c.b16 %v567, %v563
      %v688 = vpack.c.b16 %v568, %v564
      %v689 = vpack.c.b16 %v573, %v569
      %v690 = vpack.c.b16 %v574, %v570
      %v691 = vpack.c.b16 %v575, %v571
      %v692 = vpack.c.b16 %v576, %v572
      %v693 = vpack.c.b16 %v581, %v577
      %v694 = vpack.c.b16 %v582, %v578
      %v695 = vpack.c.b16 %v583, %v579
      %v696 = vpack.c.b16 %v584, %v580
      %v697 = vpack.c.b16 %v589, %v585
      %v698 = vpack.c.b16 %v590, %v586
      %v699 = vpack.c.b16 %v591, %v587
      %v700 = vpack.c.b16 %v592, %v588
      %v701 = vpack.c.b16 %v597, %v593
      %v702 = vpack.c.b16 %v598, %v594
      %v703 = vpack.c.b16 %v599, %v595
      %v704 = vpack.c.b16 %v600, %v596
      %v705 = vpack.c.b16 %v605, %v601
      %v706 = vpack.c.b16 %v606, %v602
      %v707 = vpack.c.b16 %v607, %v603
      %v708 = vpack.c.b16 %v608, %v604
      %v709 = vpack.c.b16 %v613, %v609
      %v710 = vpack.c.b16 %v614, %v610
      %v711 = vpack.c.b16 %v615, %v611
      %v712 = vpack.c.b16 %v616, %v612
      %v713 = vpack.c.b16 %v621, %v617
      %v714 = vpack.c.b16 %v622, %v618
      %v715 = vpack.c.b16 %v623, %v619
      %v716 = vpack.c.b16 %v624, %v620
      %v717 = vpack.c.b16 %v629, %v625
      %v718 = vpack.c.b16 %v630, %v626
      %v719 = vpack.c.b16 %v631, %v627
      %v720 = vpack.c.b16 %v632, %v628
      %v721 = vpack.c.b16 %v637, %v633
      %v722 = vpack.c.b16 %v638, %v634
      %v723 = vpack.c.b16 %v639, %v635
      %v724 = vpack.c.b16 %v640, %v636
      %v725 = vpack.c.b16 %v645, %v641
      %v726 = vpack.c.b16 %v646, %v642
      %v727 = vpack.c.b16 %v647, %v643
      %v728 = vpack.c.b16 %v648, %v644
      %v729 = vpack.c.b16 %v653, %v649
      %v730 = vpack.c.b16 %v654, %v650
      %v731 = vpack.c.b16 %v655, %v651
      %v732 = vpack.c.b16 %v656, %v652
      %v733 = vpack.c.b16 %v661, %v657
      %v734 = vpack.c.b16 %v662, %v658
      %v735 = vpack.c.b16 %v663, %v659
      %v736 = vpack.c.b16 %v664, %v660
      %v737 = vpack.c.b16 %v669, %v665
      %v738 = vpack.c.b16 %v670, %v666
      %v739 = vpack.c.b16 %v671, %v667
      %v740 = vpack.c.b16 %v672, %v668
      %v741 = vpack.c.b16 %v677, %v673
      %v742 = vpack.c.b16 %v678, %v674
      %v743 = vpack.c.b16 %v679, %v675
      %v744 = vpack.c.b16 %v680, %v676
      %809 = vmatprep.subr.bf16.mxu0 %v682
      %810 = vmatpush1.bf16.msra.mxu0 %v681
      %811 = vmatprep.subr.bf16.mxu0 %v686
      %812 = vmatpush1.bf16.msra.mxu0 %v685
      %813 = vmatprep.subr.bf16.mxu0 %v690
      %814 = vmatpush1.bf16.msra.mxu0 %v689
      %815 = vmatprep.subr.bf16.mxu0 %v694
      %816 = vmatpush1.bf16.msra.mxu0 %v693
      %817 = vmatprep.subr.bf16.mxu0 %v698
      %818 = vmatpush1.bf16.msra.mxu0 %v697
      %819 = vmatprep.subr.bf16.mxu0 %v702
      %820 = vmatpush1.bf16.msra.mxu0 %v701
      %821 = vmatprep.subr.bf16.mxu0 %v706
      %822 = vmatpush1.bf16.msra.mxu0 %v705
      %823 = vmatprep.subr.bf16.mxu0 %v710
      %824 = vmatpush1.bf16.msra.mxu0 %v709
      %825 = vmatprep.subr.bf16.mxu0 %v714
      %826 = vmatpush1.bf16.msra.mxu0 %v713
      %827 = vmatprep.subr.bf16.mxu0 %v718
      %828 = vmatpush1.bf16.msra.mxu0 %v717
      %829 = vmatprep.subr.bf16.mxu0 %v722
      %830 = vmatpush1.bf16.msra.mxu0 %v721
      %831 = vmatprep.subr.bf16.mxu0 %v726
      %832 = vmatpush1.bf16.msra.mxu0 %v725
      %833 = vmatprep.subr.bf16.mxu0 %v730
      %834 = vmatpush1.bf16.msra.mxu0 %v729
      %835 = vmatprep.subr.bf16.mxu0 %v734
      %836 = vmatpush1.bf16.msra.mxu0 %v733
      %837 = vmatprep.subr.bf16.mxu0 %v738
      %838 = vmatpush1.bf16.msra.mxu0 %v737
      %839 = vmatprep.subr.bf16.mxu0 %v742
      %840 = vmatpush1.bf16.msra.mxu0 %v741
      %841 = vmatprep.mubr.bf16.mxu0 %v482
      %842 = vmatmul.mubr.bf16.gmra.mrb[0].mxu0 %v481
      %v843 = vpop.f32.mrb[0].mxu0
      %v844 = vadd.f32 %v455, %v843
      %v845 = vpop.f32.mrb[0].mxu0
      %v846 = vadd.f32 %v459, %v845
      %v847 = vpop.f32.mrb[0].mxu0
      %v848 = vadd.f32 %v455, %v847
      %v849 = vpop.f32.mrb[0].mxu0
      %v850 = vadd.f32 %v459, %v849
      %851 = vmatprep.mubr.bf16.mxu0 %v484
      %852 = vmatmul.mubr.bf16.gmra.mrb[0].mxu0 %v483
      %v853 = vpop.f32.mrb[0].mxu0
      %v854 = vadd.f32 %v455, %v853
      %v855 = vpop.f32.mrb[0].mxu0
      %v856 = vadd.f32 %v459, %v855
      %v857 = vpop.f32.mrb[0].mxu0
      %v858 = vpop.f32.mrb[0].mxu0
      %859 = vdwg.mxu0
      %860 = vmatprep.subr.bf16.mxu0 %v684
      %861 = vmatpush1.bf16.msra.mxu0 %v683
      %862 = vmatprep.subr.bf16.mxu0 %v688
      %863 = vmatpush1.bf16.msra.mxu0 %v687
      %864 = vmatprep.subr.bf16.mxu0 %v692
      %865 = vmatpush1.bf16.msra.mxu0 %v691
      %866 = vmatprep.subr.bf16.mxu0 %v696
      %867 = vmatpush1.bf16.msra.mxu0 %v695
      %868 = vmatprep.subr.bf16.mxu0 %v700
      %869 = vmatpush1.bf16.msra.mxu0 %v699
      %870 = vmatprep.subr.bf16.mxu0 %v704
      %871 = vmatpush1.bf16.msra.mxu0 %v703
      %872 = vmatprep.subr.bf16.mxu0 %v708
      %873 = vmatpush1.bf16.msra.mxu0 %v707
      %874 = vmatprep.subr.bf16.mxu0 %v712
      %875 = vmatpush1.bf16.msra.mxu0 %v711
      %876 = vmatprep.subr.bf16.mxu0 %v716
      %877 = vmatpush1.bf16.msra.mxu0 %v715
      %878 = vmatprep.subr.bf16.mxu0 %v720
      %879 = vmatpush1.bf16.msra.mxu0 %v719
      %880 = vmatprep.subr.bf16.mxu0 %v724
      %881 = vmatpush1.bf16.msra.mxu0 %v723
      %882 = vmatprep.subr.bf16.mxu0 %v728
      %883 = vmatpush1.bf16.msra.mxu0 %v727
      %884 = vmatprep.subr.bf16.mxu0 %v732
      %885 = vmatpush1.bf16.msra.mxu0 %v731
      %886 = vmatprep.subr.bf16.mxu0 %v736
      %887 = vmatpush1.bf16.msra.mxu0 %v735
      %888 = vmatprep.subr.bf16.mxu0 %v740
      %889 = vmatpush1.bf16.msra.mxu0 %v739
      %890 = vmatprep.subr.bf16.mxu0 %v744
      %891 = vmatpush1.bf16.msra.mxu0 %v743
      %892 = vmatprep.mubr.bf16.mxu0 %v482
      %893 = vmatmul.mubr.bf16.gmra.mrb[0].mxu0 %v481
      %v894 = vpop.f32.mrb[0].mxu0
      %v895 = vadd.f32 %v463, %v894
      %v896 = vpop.f32.mrb[0].mxu0
      %v897 = vadd.f32 %v467, %v896
      %v898 = vpop.f32.mrb[0].mxu0
      %v899 = vadd.f32 %v463, %v898
      %v900 = vpop.f32.mrb[0].mxu0
      %v901 = vadd.f32 %v467, %v900
      %902 = vmatprep.mubr.bf16.mxu0 %v484
      %903 = vmatmul.mubr.bf16.gmra.mrb[0].mxu0 %v483
      %v904 = vpop.f32.mrb[0].mxu0
      %v905 = vadd.f32 %v463, %v904
      %v906 = vpop.f32.mrb[0].mxu0
      %v907 = vadd.f32 %v467, %v906
      %v908 = vpop.f32.mrb[0].mxu0
      %v909 = vpop.f32.mrb[0].mxu0
      %910 = vdwg.mxu0
      %vm911 = vcmp.gt.f32.partialorder %v844, 0.0
      %vm912 = vcmp.gt.f32.partialorder %v846, 0.0
      %vm913 = vcmp.gt.f32.partialorder %v895, 0.0
      %vm914 = vcmp.gt.f32.partialorder %v897, 0.0
      %vm915 = vcmp.gt.f32.partialorder %v848, 0.0
      %vm916 = vcmp.gt.f32.partialorder %v850, 0.0
      %vm917 = vcmp.gt.f32.partialorder %v899, 0.0
      %vm918 = vcmp.gt.f32.partialorder %v901, 0.0
      %vm919 = vcmp.gt.f32.partialorder %v854, 0.0
      %vm920 = vcmp.gt.f32.partialorder %v856, 0.0
      %vm921 = vcmp.gt.f32.partialorder %v905, 0.0
      %vm922 = vcmp.gt.f32.partialorder %v907, 0.0
      %v923 = vmin.f32 %v844, 0.0
      %v924 = vmin.f32 %v846, 0.0
      %v925 = vmin.f32 %v895, 0.0
      %v926 = vmin.f32 %v897, 0.0
      %v927 = vmin.f32 %v848, 0.0
      %v928 = vmin.f32 %v850, 0.0
      %v929 = vmin.f32 %v899, 0.0
      %v930 = vmin.f32 %v901, 0.0
      %v931 = vmin.f32 %v854, 0.0
      %v932 = vmin.f32 %v856, 0.0
      %v933 = vmin.f32 %v905, 0.0
      %v934 = vmin.f32 %v907, 0.0
      %v935 = vmul.f32 %v923, 1.442695
      %v936 = vpow.pop %v935
      %v937 = vmul.f32 %v924, 1.442695
      %v938 = vpow.pop %v937
      %v939 = vmul.f32 %v925, 1.442695
      %v940 = vpow.pop %v939
      %v941 = vmul.f32 %v926, 1.442695
      %v942 = vpow.pop %v941
      %v943 = vmul.f32 %v927, 1.442695
      %v944 = vpow.pop %v943
      %v945 = vmul.f32 %v928, 1.442695
      %v946 = vpow.pop %v945
      %v947 = vmul.f32 %v929, 1.442695
      %v948 = vpow.pop %v947
      %v949 = vmul.f32 %v930, 1.442695
      %v950 = vpow.pop %v949
      %v951 = vmul.f32 %v931, 1.442695
      %v952 = vpow.pop %v951
      %v953 = vmul.f32 %v932, 1.442695
      %v954 = vpow.pop %v953
      %v955 = vmul.f32 %v933, 1.442695
      %v956 = vpow.pop %v955
      %v957 = vmul.f32 %v934, 1.442695
      %v958 = vpow.pop %v957
      %v959 = vsub.f32 %v936, 1.0
      %v960 = vsub.f32 %v938, 1.0
      %v961 = vsub.f32 %v940, 1.0
      %v962 = vsub.f32 %v942, 1.0
      %v963 = vsub.f32 %v944, 1.0
      %v964 = vsub.f32 %v946, 1.0
      %v965 = vsub.f32 %v948, 1.0
      %v966 = vsub.f32 %v950, 1.0
      %v967 = vsub.f32 %v952, 1.0
      %v968 = vsub.f32 %v954, 1.0
      %v969 = vsub.f32 %v956, 1.0
      %v970 = vsub.f32 %v958, 1.0
      %v971 = vsel %vm911, %v844, %v959
      %v972 = vsel %vm912, %v846, %v960
      %v973 = vsel %vm913, %v895, %v961
      %v974 = vsel %vm914, %v897, %v962
      %v975 = vsel %vm915, %v848, %v963
      %v976 = vsel %vm916, %v850, %v964
      %v977 = vsel %vm917, %v899, %v965
      %v978 = vsel %vm918, %v901, %v966
      %v979 = vsel %vm919, %v854, %v967
      %v980 = vsel %vm920, %v856, %v968
      %v981 = vsel %vm921, %v905, %v969
      %v982 = vsel %vm922, %v907, %v970
      %v983 = vpack.c.bf16 %v975, %v971
      %v984 = vpack.c.bf16 %v976, %v972
      %v985 = vpack.c.bf16 %v977, %v973
      %v986 = vpack.c.bf16 %v978, %v974
      %v987 = vpack.c.bf16 %v979, %v979
      %v988 = vpack.c.bf16 %v980, %v980
      %v989 = vpack.c.bf16 %v981, %v981
      %v990 = vpack.c.bf16 %v982, %v982
      %v991 = vld [vmem:[%s3] sm:$0xff]
      %v992 = vld [vmem:[%s3 + $0x8] sm:$0xf]
      %v993 = vld [vmem:[%s3 + $0xc] sm:$0xff]
      %v994 = vld [vmem:[%s3 + $0x14] sm:$0xf]
      %v995 = vld [vmem:[%s3 + $0x18] sm:$0xff]
      %v996 = vld [vmem:[%s3 + $0x20] sm:$0xf]
      %v997 = vld [vmem:[%s3 + $0x24] sm:$0xff]
      %v998 = vld [vmem:[%s3 + $0x2c] sm:$0xf]
      %v999 = vld [vmem:[%s3 + $0x30] sm:$0xff]
      %v1000 = vld [vmem:[%s3 + $0x38] sm:$0xf]
      %v1001 = vld [vmem:[%s3 + $0x3c] sm:$0xff]
      %v1002 = vld [vmem:[%s3 + $0x44] sm:$0xf]
      %v1003 = vld [vmem:[%s3 + $0x48] sm:$0xff]
      %v1004 = vld [vmem:[%s3 + $0x50] sm:$0xf]
      %v1005 = vld [vmem:[%s3 + $0x54] sm:$0xff]
      %v1006 = vld [vmem:[%s3 + $0x5c] sm:$0xf]
      %v1007 = vld [vmem:[%s3 + $0x60] sm:$0xff]
      %v1008 = vld [vmem:[%s3 + $0x68] sm:$0xf]
      %v1009 = vld [vmem:[%s3 + $0x6c] sm:$0xff]
      %v1010 = vld [vmem:[%s3 + $0x74] sm:$0xf]
      %v1011 = vld [vmem:[%s3 + $0x78] sm:$0xff]
      %v1012 = vld [vmem:[%s3 + $0x80] sm:$0xf]
      %v1013 = vld [vmem:[%s3 + $0x84] sm:$0xff]
      %v1014 = vld [vmem:[%s3 + $0x8c] sm:$0xf]
      %v1015 = vld [vmem:[%s3 + $0x90] sm:$0xff]
      %v1016 = vld [vmem:[%s3 + $0x98] sm:$0xf]
      %v1017 = vld [vmem:[%s3 + $0x9c] sm:$0xff]
      %v1018 = vld [vmem:[%s3 + $0xa4] sm:$0xf]
      %v1019 = vld [vmem:[%s3 + $0xa8] sm:$0xff]
      %v1020 = vld [vmem:[%s3 + $0xb0] sm:$0xf]
      %v1021 = vld [vmem:[%s3 + $0xb4] sm:$0xff]
      %v1022 = vld [vmem:[%s3 + $0xbc] sm:$0xf]
      %v1023 = vld [vmem:[%s3 + $0xc0] sm:$0xff]
      %v1024 = vld [vmem:[%s3 + $0xc8] sm:$0xf]
      %v1025 = vld [vmem:[%s3 + $0xcc] sm:$0xff]
      %v1026 = vld [vmem:[%s3 + $0xd4] sm:$0xf]
      %v1027 = vld [vmem:[%s3 + $0xd8] sm:$0xff]
      %v1028 = vld [vmem:[%s3 + $0xe0] sm:$0xf]
      %v1029 = vld [vmem:[%s3 + $0xe4] sm:$0xff]
      %v1030 = vld [vmem:[%s3 + $0xec] sm:$0xf]
      %v1031 = vld [vmem:[%s3 + $0xf0] sm:$0xff]
      %v1032 = vld [vmem:[%s3 + $0xf8] sm:$0xf]
      %v1033 = vld [vmem:[%s3 + $0xfc] sm:$0xff]
      %v1034 = vld [vmem:[%s3 + $0x104] sm:$0xf]
      %v1035 = vld [vmem:[%s3 + $0x108] sm:$0xff]
      %v1036 = vld [vmem:[%s3 + $0x110] sm:$0xf]
      %v1037 = vld [vmem:[%s3 + $0x114] sm:$0xff]
      %v1038 = vld [vmem:[%s3 + $0x11c] sm:$0xf]
      %v1039 = vld [vmem:[%s3 + $0x120] sm:$0xff]
      %v1040 = vld [vmem:[%s3 + $0x128] sm:$0xf]
      %v1041 = vld [vmem:[%s3 + $0x12c] sm:$0xff]
      %v1042 = vld [vmem:[%s3 + $0x134] sm:$0xf]
      %v1043 = vld [vmem:[%s3 + $0x138] sm:$0xff]
      %v1044 = vld [vmem:[%s3 + $0x140] sm:$0xf]
      %v1045 = vld [vmem:[%s3 + $0x144] sm:$0xff]
      %v1046 = vld [vmem:[%s3 + $0x14c] sm:$0xf]
      %v1047 = vld [vmem:[%s3 + $0x150] sm:$0xff]
      %v1048 = vld [vmem:[%s3 + $0x158] sm:$0xf]
      %v1049 = vld [vmem:[%s3 + $0x15c] sm:$0xff]
      %v1050 = vld [vmem:[%s3 + $0x164] sm:$0xf]
      %v1051 = vld [vmem:[%s3 + $0x168] sm:$0xff]
      %v1052 = vld [vmem:[%s3 + $0x170] sm:$0xf]
      %v1053 = vld [vmem:[%s3 + $0x174] sm:$0xff]
      %v1054 = vld [vmem:[%s3 + $0x17c] sm:$0xf]
      %v1055 = vld [vmem:[%s3 + $0x180] sm:$0xff]
      %v1056 = vld [vmem:[%s3 + $0x188] sm:$0xf]
      %v1057 = vld [vmem:[%s3 + $0x18c] sm:$0xff]
      %v1058 = vld [vmem:[%s3 + $0x194] sm:$0xf]
      %v1059 = vld [vmem:[%s3 + $0x198] sm:$0xff]
      %v1060 = vld [vmem:[%s3 + $0x1a0] sm:$0xf]
      %v1061 = vld [vmem:[%s3 + $0x1a4] sm:$0xff]
      %v1062 = vld [vmem:[%s3 + $0x1ac] sm:$0xf]
      %v1063 = vld [vmem:[%s3 + $0x1b0] sm:$0xff]
      %v1064 = vld [vmem:[%s3 + $0x1b8] sm:$0xf]
      %v1065 = vld [vmem:[%s3 + $0x1bc] sm:$0xff]
      %v1066 = vld [vmem:[%s3 + $0x1c4] sm:$0xf]
      %v1067 = vld [vmem:[%s3 + $0x1c8] sm:$0xff]
      %v1068 = vld [vmem:[%s3 + $0x1d0] sm:$0xf]
      %v1069 = vld [vmem:[%s3 + $0x1d4] sm:$0xff]
      %v1070 = vld [vmem:[%s3 + $0x1dc] sm:$0xf]
      %v1071 = vld [vmem:[%s3 + $0x1e0] sm:$0xff]
      %v1072 = vld [vmem:[%s3 + $0x1e8] sm:$0xf]
      %v1073 = vld [vmem:[%s3 + $0x1ec] sm:$0xff]
      %v1074 = vld [vmem:[%s3 + $0x1f4] sm:$0xf]
      %v1075 = vld [vmem:[%s3 + $0x1f8] sm:$0xff]
      %v1076 = vld [vmem:[%s3 + $0x200] sm:$0xf]
      %v1077 = vld [vmem:[%s3 + $0x204] sm:$0xff]
      %v1078 = vld [vmem:[%s3 + $0x20c] sm:$0xf]
      %v1079 = vld [vmem:[%s3 + $0x210] sm:$0xff]
      %v1080 = vld [vmem:[%s3 + $0x218] sm:$0xf]
      %v1081 = vld [vmem:[%s3 + $0x21c] sm:$0xff]
      %v1082 = vld [vmem:[%s3 + $0x224] sm:$0xf]
      %v1083 = vld [vmem:[%s3 + $0x228] sm:$0xff]
      %v1084 = vld [vmem:[%s3 + $0x230] sm:$0xf]
      %v1085 = vld [vmem:[%s3 + $0x234] sm:$0xff]
      %v1086 = vld [vmem:[%s3 + $0x23c] sm:$0xf]
      %v1087 = vld [vmem:[%s3 + $0x240] sm:$0xff]
      %v1088 = vld [vmem:[%s3 + $0x248] sm:$0xf]
      %v1089 = vld [vmem:[%s3 + $0x24c] sm:$0xff]
      %v1090 = vld [vmem:[%s3 + $0x254] sm:$0xf]
      %v1091 = vld [vmem:[%s3 + $0x258] sm:$0xff]
      %v1092 = vld [vmem:[%s3 + $0x260] sm:$0xf]
      %v1093 = vld [vmem:[%s3 + $0x264] sm:$0xff]
      %v1094 = vld [vmem:[%s3 + $0x26c] sm:$0xf]
      %v1095 = vld [vmem:[%s3 + $0x270] sm:$0xff]
      %v1096 = vld [vmem:[%s3 + $0x278] sm:$0xf]
      %v1097 = vld [vmem:[%s3 + $0x27c] sm:$0xff]
      %v1098 = vld [vmem:[%s3 + $0x284] sm:$0xf]
      %v1099 = vld [vmem:[%s3 + $0x288] sm:$0xff]
      %v1100 = vld [vmem:[%s3 + $0x290] sm:$0xf]
      %v1101 = vld [vmem:[%s3 + $0x294] sm:$0xff]
      %v1102 = vld [vmem:[%s3 + $0x29c] sm:$0xf]
      %v1103 = vld [vmem:[%s3 + $0x2a0] sm:$0xff]
      %v1104 = vld [vmem:[%s3 + $0x2a8] sm:$0xf]
      %v1105 = vld [vmem:[%s3 + $0x2ac] sm:$0xff]
      %v1106 = vld [vmem:[%s3 + $0x2b4] sm:$0xf]
      %v1107 = vld [vmem:[%s3 + $0x2b8] sm:$0xff]
      %v1108 = vld [vmem:[%s3 + $0x2c0] sm:$0xf]
      %v1109 = vld [vmem:[%s3 + $0x2c4] sm:$0xff]
      %v1110 = vld [vmem:[%s3 + $0x2cc] sm:$0xf]
      %v1111 = vld [vmem:[%s3 + $0x2d0] sm:$0xff]
      %v1112 = vld [vmem:[%s3 + $0x2d8] sm:$0xf]
      %v1113 = vld [vmem:[%s3 + $0x2dc] sm:$0xff]
      %v1114 = vld [vmem:[%s3 + $0x2e4] sm:$0xf]
      %v1115 = vld [vmem:[%s3 + $0x2e8] sm:$0xff]
      %v1116 = vld [vmem:[%s3 + $0x2f0] sm:$0xf]
      %v1117 = vld [vmem:[%s3 + $0x2f4] sm:$0xff]
      %v1118 = vld [vmem:[%s3 + $0x2fc] sm:$0xf]
      %v1119 = vld [vmem:[%s4] sm:$0x7]
      %v1121 = vlaneseq
      %v1122 = vshrl.u32 %v1121, 7
      %v1123 = vsub.s32 0, %v1122
      %v1124 = vrot.slane %v1119, %v1123
      %v1125 = vlaneseq
      %v1126 = vshrl.u32 %v1125, 7
      %v1127 = vsub.s32 1, %v1126
      %v1128 = vrot.slane %v1119, %v1127
      %v1129 = vlaneseq
      %v1130 = vshrl.u32 %v1129, 7
      %v1131 = vsub.s32 2, %v1130
      %v1132 = vrot.slane %v1119, %v1131
      %v1264 = vunpack.c.l.b16 %v991
      %v1265 = vunpack.c.h.b16 %v991
      %v1266 = vunpack.c.l.b16 %v992
      %v1267 = vunpack.c.l.b16 %v993
      %v1268 = vunpack.c.h.b16 %v993
      %v1269 = vunpack.c.l.b16 %v994
      %v1270 = vunpack.c.l.b16 %v995
      %v1271 = vunpack.c.h.b16 %v995
      %v1272 = vunpack.c.l.b16 %v996
      %v1273 = vunpack.c.l.b16 %v997
      %v1274 = vunpack.c.h.b16 %v997
      %v1275 = vunpack.c.l.b16 %v998
      %v1276 = vunpack.c.l.b16 %v999
      %v1277 = vunpack.c.h.b16 %v999
      %v1278 = vunpack.c.l.b16 %v1000
      %v1279 = vunpack.c.l.b16 %v1001
      %v1280 = vunpack.c.h.b16 %v1001
      %v1281 = vunpack.c.l.b16 %v1002
      %v1282 = vunpack.c.l.b16 %v1003
      %v1283 = vunpack.c.h.b16 %v1003
      %v1284 = vunpack.c.l.b16 %v1004
      %v1285 = vunpack.c.l.b16 %v1005
      %v1286 = vunpack.c.h.b16 %v1005
      %v1287 = vunpack.c.l.b16 %v1006
      %v1288 = vunpack.c.l.b16 %v1007
      %v1289 = vunpack.c.h.b16 %v1007
      %v1290 = vunpack.c.l.b16 %v1008
      %v1291 = vunpack.c.l.b16 %v1009
      %v1292 = vunpack.c.h.b16 %v1009
      %v1293 = vunpack.c.l.b16 %v1010
      %v1294 = vunpack.c.l.b16 %v1011
      %v1295 = vunpack.c.h.b16 %v1011
      %v1296 = vunpack.c.l.b16 %v1012
      %v1297 = vunpack.c.l.b16 %v1013
      %v1298 = vunpack.c.h.b16 %v1013
      %v1299 = vunpack.c.l.b16 %v1014
      %v1300 = vunpack.c.l.b16 %v1015
      %v1301 = vunpack.c.h.b16 %v1015
      %v1302 = vunpack.c.l.b16 %v1016
      %v1303 = vunpack.c.l.b16 %v1017
      %v1304 = vunpack.c.h.b16 %v1017
      %v1305 = vunpack.c.l.b16 %v1018
      %v1306 = vunpack.c.l.b16 %v1019
      %v1307 = vunpack.c.h.b16 %v1019
      %v1308 = vunpack.c.l.b16 %v1020
      %v1309 = vunpack.c.l.b16 %v1021
      %v1310 = vunpack.c.h.b16 %v1021
      %v1311 = vunpack.c.l.b16 %v1022
      %v1312 = vunpack.c.l.b16 %v1023
      %v1313 = vunpack.c.h.b16 %v1023
      %v1314 = vunpack.c.l.b16 %v1024
      %v1315 = vunpack.c.l.b16 %v1025
      %v1316 = vunpack.c.h.b16 %v1025
      %v1317 = vunpack.c.l.b16 %v1026
      %v1318 = vunpack.c.l.b16 %v1027
      %v1319 = vunpack.c.h.b16 %v1027
      %v1320 = vunpack.c.l.b16 %v1028
      %v1321 = vunpack.c.l.b16 %v1029
      %v1322 = vunpack.c.h.b16 %v1029
      %v1323 = vunpack.c.l.b16 %v1030
      %v1324 = vunpack.c.l.b16 %v1031
      %v1325 = vunpack.c.h.b16 %v1031
      %v1326 = vunpack.c.l.b16 %v1032
      %v1327 = vunpack.c.l.b16 %v1033
      %v1328 = vunpack.c.h.b16 %v1033
      %v1329 = vunpack.c.l.b16 %v1034
      %v1330 = vunpack.c.l.b16 %v1035
      %v1331 = vunpack.c.h.b16 %v1035
      %v1332 = vunpack.c.l.b16 %v1036
      %v1333 = vunpack.c.l.b16 %v1037
      %v1334 = vunpack.c.h.b16 %v1037
      %v1335 = vunpack.c.l.b16 %v1038
      %v1336 = vunpack.c.l.b16 %v1039
      %v1337 = vunpack.c.h.b16 %v1039
      %v1338 = vunpack.c.l.b16 %v1040
      %v1339 = vunpack.c.l.b16 %v1041
      %v1340 = vunpack.c.h.b16 %v1041
      %v1341 = vunpack.c.l.b16 %v1042
      %v1342 = vunpack.c.l.b16 %v1043
      %v1343 = vunpack.c.h.b16 %v1043
      %v1344 = vunpack.c.l.b16 %v1044
      %v1345 = vunpack.c.l.b16 %v1045
      %v1346 = vunpack.c.h.b16 %v1045
      %v1347 = vunpack.c.l.b16 %v1046
      %v1348 = vunpack.c.l.b16 %v1047
      %v1349 = vunpack.c.h.b16 %v1047
      %v1350 = vunpack.c.l.b16 %v1048
      %v1351 = vunpack.c.l.b16 %v1049
      %v1352 = vunpack.c.h.b16 %v1049
      %v1353 = vunpack.c.l.b16 %v1050
      %v1354 = vunpack.c.l.b16 %v1051
      %v1355 = vunpack.c.h.b16 %v1051
      %v1356 = vunpack.c.l.b16 %v1052
      %v1357 = vunpack.c.l.b16 %v1053
      %v1358 = vunpack.c.h.b16 %v1053
      %v1359 = vunpack.c.l.b16 %v1054
      %v1360 = vunpack.c.l.b16 %v1055
      %v1361 = vunpack.c.h.b16 %v1055
      %v1362 = vunpack.c.l.b16 %v1056
      %v1363 = vunpack.c.l.b16 %v1057
      %v1364 = vunpack.c.h.b16 %v1057
      %v1365 = vunpack.c.l.b16 %v1058
      %v1366 = vunpack.c.l.b16 %v1059
      %v1367 = vunpack.c.h.b16 %v1059
      %v1368 = vunpack.c.l.b16 %v1060
      %v1369 = vunpack.c.l.b16 %v1061
      %v1370 = vunpack.c.h.b16 %v1061
      %v1371 = vunpack.c.l.b16 %v1062
      %v1372 = vunpack.c.l.b16 %v1063
      %v1373 = vunpack.c.h.b16 %v1063
      %v1374 = vunpack.c.l.b16 %v1064
      %v1375 = vunpack.c.l.b16 %v1065
      %v1376 = vunpack.c.h.b16 %v1065
      %v1377 = vunpack.c.l.b16 %v1066
      %v1378 = vunpack.c.l.b16 %v1067
      %v1379 = vunpack.c.h.b16 %v1067
      %v1380 = vunpack.c.l.b16 %v1068
      %v1381 = vunpack.c.l.b16 %v1069
      %v1382 = vunpack.c.h.b16 %v1069
      %v1383 = vunpack.c.l.b16 %v1070
      %v1384 = vunpack.c.l.b16 %v1071
      %v1385 = vunpack.c.h.b16 %v1071
      %v1386 = vunpack.c.l.b16 %v1072
      %v1387 = vunpack.c.l.b16 %v1073
      %v1388 = vunpack.c.h.b16 %v1073
      %v1389 = vunpack.c.l.b16 %v1074
      %v1390 = vunpack.c.l.b16 %v1075
      %v1391 = vunpack.c.h.b16 %v1075
      %v1392 = vunpack.c.l.b16 %v1076
      %v1393 = vunpack.c.l.b16 %v1077
      %v1394 = vunpack.c.h.b16 %v1077
      %v1395 = vunpack.c.l.b16 %v1078
      %v1396 = vunpack.c.l.b16 %v1079
      %v1397 = vunpack.c.h.b16 %v1079
      %v1398 = vunpack.c.l.b16 %v1080
      %v1399 = vunpack.c.l.b16 %v1081
      %v1400 = vunpack.c.h.b16 %v1081
      %v1401 = vunpack.c.l.b16 %v1082
      %v1402 = vunpack.c.l.b16 %v1083
      %v1403 = vunpack.c.h.b16 %v1083
      %v1404 = vunpack.c.l.b16 %v1084
      %v1405 = vunpack.c.l.b16 %v1085
      %v1406 = vunpack.c.h.b16 %v1085
      %v1407 = vunpack.c.l.b16 %v1086
      %v1408 = vunpack.c.l.b16 %v1087
      %v1409 = vunpack.c.h.b16 %v1087
      %v1410 = vunpack.c.l.b16 %v1088
      %v1411 = vunpack.c.l.b16 %v1089
      %v1412 = vunpack.c.h.b16 %v1089
      %v1413 = vunpack.c.l.b16 %v1090
      %v1414 = vunpack.c.l.b16 %v1091
      %v1415 = vunpack.c.h.b16 %v1091
      %v1416 = vunpack.c.l.b16 %v1092
      %v1417 = vunpack.c.l.b16 %v1093
      %v1418 = vunpack.c.h.b16 %v1093
      %v1419 = vunpack.c.l.b16 %v1094
      %v1420 = vunpack.c.l.b16 %v1095
      %v1421 = vunpack.c.h.b16 %v1095
      %v1422 = vunpack.c.l.b16 %v1096
      %v1423 = vunpack.c.l.b16 %v1097
      %v1424 = vunpack.c.h.b16 %v1097
      %v1425 = vunpack.c.l.b16 %v1098
      %v1426 = vunpack.c.l.b16 %v1099
      %v1427 = vunpack.c.h.b16 %v1099
      %v1428 = vunpack.c.l.b16 %v1100
      %v1429 = vunpack.c.l.b16 %v1101
      %v1430 = vunpack.c.h.b16 %v1101
      %v1431 = vunpack.c.l.b16 %v1102
      %v1432 = vunpack.c.l.b16 %v1103
      %v1433 = vunpack.c.h.b16 %v1103
      %v1434 = vunpack.c.l.b16 %v1104
      %v1435 = vunpack.c.l.b16 %v1105
      %v1436 = vunpack.c.h.b16 %v1105
      %v1437 = vunpack.c.l.b16 %v1106
      %v1438 = vunpack.c.l.b16 %v1107
      %v1439 = vunpack.c.h.b16 %v1107
      %v1440 = vunpack.c.l.b16 %v1108
      %v1441 = vunpack.c.l.b16 %v1109
      %v1442 = vunpack.c.h.b16 %v1109
      %v1443 = vunpack.c.l.b16 %v1110
      %v1444 = vunpack.c.l.b16 %v1111
      %v1445 = vunpack.c.h.b16 %v1111
      %v1446 = vunpack.c.l.b16 %v1112
      %v1447 = vunpack.c.l.b16 %v1113
      %v1448 = vunpack.c.h.b16 %v1113
      %v1449 = vunpack.c.l.b16 %v1114
      %v1450 = vunpack.c.l.b16 %v1115
      %v1451 = vunpack.c.h.b16 %v1115
      %v1452 = vunpack.c.l.b16 %v1116
      %v1453 = vunpack.c.l.b16 %v1117
      %v1454 = vunpack.c.h.b16 %v1117
      %v1455 = vunpack.c.l.b16 %v1118
      %v1456 = vpack.c.b16 %v1267, %v1264
      %v1457 = vpack.c.b16 %v1268, %v1265
      %v1458 = vpack.c.b16 %v1269, %v1266
      %v1459 = vpack.c.b16 %v1273, %v1270
      %v1460 = vpack.c.b16 %v1274, %v1271
      %v1461 = vpack.c.b16 %v1275, %v1272
      %v1462 = vpack.c.b16 %v1279, %v1276
      %v1463 = vpack.c.b16 %v1280, %v1277
      %v1464 = vpack.c.b16 %v1281, %v1278
      %v1465 = vpack.c.b16 %v1285, %v1282
      %v1466 = vpack.c.b16 %v1286, %v1283
      %v1467 = vpack.c.b16 %v1287, %v1284
      %v1468 = vpack.c.b16 %v1291, %v1288
      %v1469 = vpack.c.b16 %v1292, %v1289
      %v1470 = vpack.c.b16 %v1293, %v1290
      %v1471 = vpack.c.b16 %v1297, %v1294
      %v1472 = vpack.c.b16 %v1298, %v1295
      %v1473 = vpack.c.b16 %v1299, %v1296
      %v1474 = vpack.c.b16 %v1303, %v1300
      %v1475 = vpack.c.b16 %v1304, %v1301
      %v1476 = vpack.c.b16 %v1305, %v1302
      %v1477 = vpack.c.b16 %v1309, %v1306
      %v1478 = vpack.c.b16 %v1310, %v1307
      %v1479 = vpack.c.b16 %v1311, %v1308
      %v1480 = vpack.c.b16 %v1315, %v1312
      %v1481 = vpack.c.b16 %v1316, %v1313
      %v1482 = vpack.c.b16 %v1317, %v1314
      %v1483 = vpack.c.b16 %v1321, %v1318
      %v1484 = vpack.c.b16 %v1322, %v1319
      %v1485 = vpack.c.b16 %v1323, %v1320
      %v1486 = vpack.c.b16 %v1327, %v1324
      %v1487 = vpack.c.b16 %v1328, %v1325
      %v1488 = vpack.c.b16 %v1329, %v1326
      %v1489 = vpack.c.b16 %v1333, %v1330
      %v1490 = vpack.c.b16 %v1334, %v1331
      %v1491 = vpack.c.b16 %v1335, %v1332
      %v1492 = vpack.c.b16 %v1339, %v1336
      %v1493 = vpack.c.b16 %v1340, %v1337
      %v1494 = vpack.c.b16 %v1341, %v1338
      %v1495 = vpack.c.b16 %v1345, %v1342
      %v1496 = vpack.c.b16 %v1346, %v1343
      %v1497 = vpack.c.b16 %v1347, %v1344
      %v1498 = vpack.c.b16 %v1351, %v1348
      %v1499 = vpack.c.b16 %v1352, %v1349
      %v1500 = vpack.c.b16 %v1353, %v1350
      %v1501 = vpack.c.b16 %v1357, %v1354
      %v1502 = vpack.c.b16 %v1358, %v1355
      %v1503 = vpack.c.b16 %v1359, %v1356
      %v1504 = vpack.c.b16 %v1363, %v1360
      %v1505 = vpack.c.b16 %v1364, %v1361
      %v1506 = vpack.c.b16 %v1365, %v1362
      %v1507 = vpack.c.b16 %v1369, %v1366
      %v1508 = vpack.c.b16 %v1370, %v1367
      %v1509 = vpack.c.b16 %v1371, %v1368
      %v1510 = vpack.c.b16 %v1375, %v1372
      %v1511 = vpack.c.b16 %v1376, %v1373
      %v1512 = vpack.c.b16 %v1377, %v1374
      %v1513 = vpack.c.b16 %v1381, %v1378
      %v1514 = vpack.c.b16 %v1382, %v1379
      %v1515 = vpack.c.b16 %v1383, %v1380
      %v1516 = vpack.c.b16 %v1387, %v1384
      %v1517 = vpack.c.b16 %v1388, %v1385
      %v1518 = vpack.c.b16 %v1389, %v1386
      %v1519 = vpack.c.b16 %v1393, %v1390
      %v1520 = vpack.c.b16 %v1394, %v1391
      %v1521 = vpack.c.b16 %v1395, %v1392
      %v1522 = vpack.c.b16 %v1399, %v1396
      %v1523 = vpack.c.b16 %v1400, %v1397
      %v1524 = vpack.c.b16 %v1401, %v1398
      %v1525 = vpack.c.b16 %v1405, %v1402
      %v1526 = vpack.c.b16 %v1406, %v1403
      %v1527 = vpack.c.b16 %v1407, %v1404
      %v1528 = vpack.c.b16 %v1411, %v1408
      %v1529 = vpack.c.b16 %v1412, %v1409
      %v1530 = vpack.c.b16 %v1413, %v1410
      %v1531 = vpack.c.b16 %v1417, %v1414
      %v1532 = vpack.c.b16 %v1418, %v1415
      %v1533 = vpack.c.b16 %v1419, %v1416
      %v1534 = vpack.c.b16 %v1423, %v1420
      %v1535 = vpack.c.b16 %v1424, %v1421
      %v1536 = vpack.c.b16 %v1425, %v1422
      %v1537 = vpack.c.b16 %v1429, %v1426
      %v1538 = vpack.c.b16 %v1430, %v1427
      %v1539 = vpack.c.b16 %v1431, %v1428
      %v1540 = vpack.c.b16 %v1435, %v1432
      %v1541 = vpack.c.b16 %v1436, %v1433
      %v1542 = vpack.c.b16 %v1437, %v1434
      %v1543 = vpack.c.b16 %v1441, %v1438
      %v1544 = vpack.c.b16 %v1442, %v1439
      %v1545 = vpack.c.b16 %v1443, %v1440
      %v1546 = vpack.c.b16 %v1447, %v1444
      %v1547 = vpack.c.b16 %v1448, %v1445
      %v1548 = vpack.c.b16 %v1449, %v1446
      %v1549 = vpack.c.b16 %v1453, %v1450
      %v1550 = vpack.c.b16 %v1454, %v1451
      %v1551 = vpack.c.b16 %v1455, %v1452
      %1648 = vmatprep.subr.bf16.mxu0 %v1457
      %1649 = vmatpush1.bf16.msra.mxu0 %v1456
      %1650 = vmatprep.subr.bf16.mxu0 %v1460
      %1651 = vmatpush1.bf16.msra.mxu0 %v1459
      %1652 = vmatprep.subr.bf16.mxu0 %v1463
      %1653 = vmatpush1.bf16.msra.mxu0 %v1462
      %1654 = vmatprep.subr.bf16.mxu0 %v1466
      %1655 = vmatpush1.bf16.msra.mxu0 %v1465
      %1656 = vmatprep.subr.bf16.mxu0 %v1469
      %1657 = vmatpush1.bf16.msra.mxu0 %v1468
      %1658 = vmatprep.subr.bf16.mxu0 %v1472
      %1659 = vmatpush1.bf16.msra.mxu0 %v1471
      %1660 = vmatprep.subr.bf16.mxu0 %v1475
      %1661 = vmatpush1.bf16.msra.mxu0 %v1474
      %1662 = vmatprep.subr.bf16.mxu0 %v1478
      %1663 = vmatpush1.bf16.msra.mxu0 %v1477
      %1664 = vmatprep.subr.bf16.mxu0 %v1481
      %1665 = vmatpush1.bf16.msra.mxu0 %v1480
      %1666 = vmatprep.subr.bf16.mxu0 %v1484
      %1667 = vmatpush1.bf16.msra.mxu0 %v1483
      %1668 = vmatprep.subr.bf16.mxu0 %v1487
      %1669 = vmatpush1.bf16.msra.mxu0 %v1486
      %1670 = vmatprep.subr.bf16.mxu0 %v1490
      %1671 = vmatpush1.bf16.msra.mxu0 %v1489
      %1672 = vmatprep.subr.bf16.mxu0 %v1493
      %1673 = vmatpush1.bf16.msra.mxu0 %v1492
      %1674 = vmatprep.subr.bf16.mxu0 %v1496
      %1675 = vmatpush1.bf16.msra.mxu0 %v1495
      %1676 = vmatprep.subr.bf16.mxu0 %v1499
      %1677 = vmatpush1.bf16.msra.mxu0 %v1498
      %1678 = vmatprep.subr.bf16.mxu0 %v1502
      %1679 = vmatpush1.bf16.msra.mxu0 %v1501
      %1680 = vmatprep.mubr.bf16.mxu0 %v984
      %1681 = vmatmul.mubr.bf16.gmra.mrb[0].mxu0 %v983
      %v1682 = vpop.f32.mrb[0].mxu0
      %v1683 = vadd.f32 %v1124, %v1682
      %v1684 = vpop.f32.mrb[0].mxu0
      %v1685 = vadd.f32 %v1128, %v1684
      %v1686 = vpop.f32.mrb[0].mxu0
      %v1687 = vadd.f32 %v1124, %v1686
      %v1688 = vpop.f32.mrb[0].mxu0
      %v1689 = vadd.f32 %v1128, %v1688
      %1690 = vmatprep.mubr.bf16.mxu0 %v988
      %1691 = vmatmul.mubr.bf16.gmra.mrb[0].mxu0 %v987
      %v1692 = vpop.f32.mrb[0].mxu0
      %v1693 = vadd.f32 %v1124, %v1692
      %v1694 = vpop.f32.mrb[0].mxu0
      %v1695 = vadd.f32 %v1128, %v1694
      %v1696 = vpop.f32.mrb[0].mxu0
      %v1697 = vpop.f32.mrb[0].mxu0
      %1698 = vdwg.mxu0
      %1699 = vmatprep.subr.bf16.mxu0 %v1505
      %1700 = vmatpush1.bf16.msra.mxu0 %v1504
      %1701 = vmatprep.subr.bf16.mxu0 %v1508
      %1702 = vmatpush1.bf16.msra.mxu0 %v1507
      %1703 = vmatprep.subr.bf16.mxu0 %v1511
      %1704 = vmatpush1.bf16.msra.mxu0 %v1510
      %1705 = vmatprep.subr.bf16.mxu0 %v1514
      %1706 = vmatpush1.bf16.msra.mxu0 %v1513
      %1707 = vmatprep.subr.bf16.mxu0 %v1517
      %1708 = vmatpush1.bf16.msra.mxu0 %v1516
      %1709 = vmatprep.subr.bf16.mxu0 %v1520
      %1710 = vmatpush1.bf16.msra.mxu0 %v1519
      %1711 = vmatprep.subr.bf16.mxu0 %v1523
      %1712 = vmatpush1.bf16.msra.mxu0 %v1522
      %1713 = vmatprep.subr.bf16.mxu0 %v1526
      %1714 = vmatpush1.bf16.msra.mxu0 %v1525
      %1715 = vmatprep.subr.bf16.mxu0 %v1529
      %1716 = vmatpush1.bf16.msra.mxu0 %v1528
      %1717 = vmatprep.subr.bf16.mxu0 %v1532
      %1718 = vmatpush1.bf16.msra.mxu0 %v1531
      %1719 = vmatprep.subr.bf16.mxu0 %v1535
      %1720 = vmatpush1.bf16.msra.mxu0 %v1534
      %1721 = vmatprep.subr.bf16.mxu0 %v1538
      %1722 = vmatpush1.bf16.msra.mxu0 %v1537
      %1723 = vmatprep.subr.bf16.mxu0 %v1541
      %1724 = vmatpush1.bf16.msra.mxu0 %v1540
      %1725 = vmatprep.subr.bf16.mxu0 %v1544
      %1726 = vmatpush1.bf16.msra.mxu0 %v1543
      %1727 = vmatprep.subr.bf16.mxu0 %v1547
      %1728 = vmatpush1.bf16.msra.mxu0 %v1546
      %1729 = vmatprep.subr.bf16.mxu0 %v1550
      %1730 = vmatpush1.bf16.msra.mxu0 %v1549
      %1731 = vmatprep.mubr.bf16.mxu0 %v986
      %1732 = vmatmul.mubr.bf16.gmra.mrb[0].mxu0 %v985
      %v1733 = vpop.f32.mrb[0].mxu0
      %v1734 = vadd.f32 %v1683, %v1733
      %v1735 = vpop.f32.mrb[0].mxu0
      %v1736 = vadd.f32 %v1685, %v1735
      %v1737 = vpop.f32.mrb[0].mxu0
      %v1738 = vadd.f32 %v1687, %v1737
      %v1739 = vpop.f32.mrb[0].mxu0
      %v1740 = vadd.f32 %v1689, %v1739
      %1741 = vmatprep.mubr.bf16.mxu0 %v990
      %1742 = vmatmul.mubr.bf16.gmra.mrb[0].mxu0 %v989
      %v1743 = vpop.f32.mrb[0].mxu0
      %v1744 = vadd.f32 %v1693, %v1743
      %v1745 = vpop.f32.mrb[0].mxu0
      %v1746 = vadd.f32 %v1695, %v1745
      %v1747 = vpop.f32.mrb[0].mxu0
      %v1748 = vpop.f32.mrb[0].mxu0
      %1749 = vdwg.mxu0
      %1750 = vmatprep.subr.bf16.mxu0 0
      %1751 = vmatpush1.bf16.msra.mxu0 %v1458
      %1752 = vmatprep.subr.bf16.mxu0 0
      %1753 = vmatpush1.bf16.msra.mxu0 %v1461
      %1754 = vmatprep.subr.bf16.mxu0 0
      %1755 = vmatpush1.bf16.msra.mxu0 %v1464
      %1756 = vmatprep.subr.bf16.mxu0 0
      %1757 = vmatpush1.bf16.msra.mxu0 %v1467
      %1758 = vmatprep.subr.bf16.mxu0 0
      %1759 = vmatpush1.bf16.msra.mxu0 %v1470
      %1760 = vmatprep.subr.bf16.mxu0 0
      %1761 = vmatpush1.bf16.msra.mxu0 %v1473
      %1762 = vmatprep.subr.bf16.mxu0 0
      %1763 = vmatpush1.bf16.msra.mxu0 %v1476
      %1764 = vmatprep.subr.bf16.mxu0 0
      %1765 = vmatpush1.bf16.msra.mxu0 %v1479
      %1766 = vmatprep.subr.bf16.mxu0 0
      %1767 = vmatpush1.bf16.msra.mxu0 %v1482
      %1768 = vmatprep.subr.bf16.mxu0 0
      %1769 = vmatpush1.bf16.msra.mxu0 %v1485
      %1770 = vmatprep.subr.bf16.mxu0 0
      %1771 = vmatpush1.bf16.msra.mxu0 %v1488
      %1772 = vmatprep.subr.bf16.mxu0 0
      %1773 = vmatpush1.bf16.msra.mxu0 %v1491
      %1774 = vmatprep.subr.bf16.mxu0 0
      %1775 = vmatpush1.bf16.msra.mxu0 %v1494
      %1776 = vmatprep.subr.bf16.mxu0 0
      %1777 = vmatpush1.bf16.msra.mxu0 %v1497
      %1778 = vmatprep.subr.bf16.mxu0 0
      %1779 = vmatpush1.bf16.msra.mxu0 %v1500
      %1780 = vmatprep.subr.bf16.mxu0 0
      %1781 = vmatpush1.bf16.msra.mxu0 %v1503
      %1782 = vmatprep.mubr.bf16.mxu0 %v984
      %1783 = vmatmul.mubr.bf16.gmra.mrb[0].mxu0 %v983
      %v1784 = vpop.f32.mrb[0].mxu0
      %v1785 = vadd.f32 %v1132, %v1784
      %v1786 = vpop.f32.mrb[0].mxu0
      %v1787 = vpop.f32.mrb[0].mxu0
      %v1788 = vadd.f32 %v1132, %v1787
      %v1789 = vpop.f32.mrb[0].mxu0
      %1790 = vmatprep.mubr.bf16.mxu0 %v988
      %1791 = vmatmul.mubr.bf16.gmra.mrb[0].mxu0 %v987
      %v1792 = vpop.f32.mrb[0].mxu0
      %v1793 = vadd.f32 %v1132, %v1792
      %v1794 = vpop.f32.mrb[0].mxu0
      %v1795 = vpop.f32.mrb[0].mxu0
      %v1796 = vpop.f32.mrb[0].mxu0
      %1797 = vdwg.mxu0
      %1798 = vmatprep.subr.bf16.mxu0 0
      %1799 = vmatpush1.bf16.msra.mxu0 %v1506
      %1800 = vmatprep.subr.bf16.mxu0 0
      %1801 = vmatpush1.bf16.msra.mxu0 %v1509
      %1802 = vmatprep.subr.bf16.mxu0 0
      %1803 = vmatpush1.bf16.msra.mxu0 %v1512
      %1804 = vmatprep.subr.bf16.mxu0 0
      %1805 = vmatpush1.bf16.msra.mxu0 %v1515
      %1806 = vmatprep.subr.bf16.mxu0 0
      %1807 = vmatpush1.bf16.msra.mxu0 %v1518
      %1808 = vmatprep.subr.bf16.mxu0 0
      %1809 = vmatpush1.bf16.msra.mxu0 %v1521
      %1810 = vmatprep.subr.bf16.mxu0 0
      %1811 = vmatpush1.bf16.msra.mxu0 %v1524
      %1812 = vmatprep.subr.bf16.mxu0 0
      %1813 = vmatpush1.bf16.msra.mxu0 %v1527
      %1814 = vmatprep.subr.bf16.mxu0 0
      %1815 = vmatpush1.bf16.msra.mxu0 %v1530
      %1816 = vmatprep.subr.bf16.mxu0 0
      %1817 = vmatpush1.bf16.msra.mxu0 %v1533
      %1818 = vmatprep.subr.bf16.mxu0 0
      %1819 = vmatpush1.bf16.msra.mxu0 %v1536
      %1820 = vmatprep.subr.bf16.mxu0 0
      %1821 = vmatpush1.bf16.msra.mxu0 %v1539
      %1822 = vmatprep.subr.bf16.mxu0 0
      %1823 = vmatpush1.bf16.msra.mxu0 %v1542
      %1824 = vmatprep.subr.bf16.mxu0 0
      %1825 = vmatpush1.bf16.msra.mxu0 %v1545
      %1826 = vmatprep.subr.bf16.mxu0 0
      %1827 = vmatpush1.bf16.msra.mxu0 %v1548
      %1828 = vmatprep.subr.bf16.mxu0 0
      %1829 = vmatpush1.bf16.msra.mxu0 %v1551
      %1830 = vmatprep.mubr.bf16.mxu0 %v986
      %1831 = vmatmul.mubr.bf16.gmra.mrb[0].mxu0 %v985
      %v1832 = vpop.f32.mrb[0].mxu0
      %v1833 = vadd.f32 %v1785, %v1832
      %v1834 = vpop.f32.mrb[0].mxu0
      %v1835 = vpop.f32.mrb[0].mxu0
      %v1836 = vadd.f32 %v1788, %v1835
      %v1837 = vpop.f32.mrb[0].mxu0
      %1838 = vmatprep.mubr.bf16.mxu0 %v990
      %1839 = vmatmul.mubr.bf16.gmra.mrb[0].mxu0 %v989
      %v1840 = vpop.f32.mrb[0].mxu0
      %v1841 = vadd.f32 %v1793, %v1840
      %v1842 = vpop.f32.mrb[0].mxu0
      %v1843 = vpop.f32.mrb[0].mxu0
      %v1844 = vpop.f32.mrb[0].mxu0
      %1845 = vdwg.mxu0
      %1846 = vst [vmem:[%s374] sm:$0xff] %v1734
      %1847 = vst [vmem:[%s374 + $0x8] sm:$0xff] %v1736
      %vm1848 = vcmask 523264
      %1849 = vst.msk [vmem:[%s374 + $0x10] sm:$0xff] %vm1848, %v1833
      %1850 = vst [vmem:[%s374 + $0x18] sm:$0xff] %v1738
      %1851 = vst [vmem:[%s374 + $0x20] sm:$0xff] %v1740
      %1852 = vst.msk [vmem:[%s374 + $0x28] sm:$0xff] %vm1848, %v1836
      %1853 = vst [vmem:[%s374 + $0x30] sm:$0xff] %v1744
      %1854 = vst [vmem:[%s374 + $0x38] sm:$0xff] %v1746
      %1855 = vst.msk [vmem:[%s374 + $0x40] sm:$0xff] %vm1848, %v1841
      %v1856 = vld [vmem:[%s5] sm:$0xf]
      %v1857 = vld [vmem:[%s5 + $0x4] sm:$0xf]
      %v1858 = vld [vmem:[%s5 + $0x8] sm:$0xf]
      %v1859 = vld [vmem:[%s5 + $0xc] sm:$0xf]
      %v1860 = vld [vmem:[%s5 + $0x10] sm:$0xf]
      %v1861 = vld [vmem:[%s5 + $0x14] sm:$0xf]
      %v1862 = vld [vmem:[%s5 + $0x18] sm:$0xf]
      %v1863 = vld [vmem:[%s5 + $0x1c] sm:$0xf]
      %v1864 = vld [vmem:[%s5 + $0x20] sm:$0xf]
      %v1865 = vld [vmem:[%s5 + $0x24] sm:$0xf]
      %v1866 = vld [vmem:[%s5 + $0x28] sm:$0xf]
      %v1867 = vld [vmem:[%s5 + $0x2c] sm:$0xf]
      %v1868 = vld [vmem:[%s5 + $0x30] sm:$0xf]
      %v1869 = vld [vmem:[%s5 + $0x34] sm:$0xf]
      %v1870 = vld [vmem:[%s5 + $0x38] sm:$0xf]
      %v1871 = vld [vmem:[%s5 + $0x3c] sm:$0xf]
      %v1872 = vld [vmem:[%s5 + $0x40] sm:$0xf]
      %v1873 = vld [vmem:[%s5 + $0x44] sm:$0xf]
      %v1874 = vld [vmem:[%s5 + $0x48] sm:$0xf]
      %v1875 = vld [vmem:[%s5 + $0x4c] sm:$0xf]
      %v1876 = vld [vmem:[%s5 + $0x50] sm:$0xf]
      %v1877 = vld [vmem:[%s5 + $0x54] sm:$0xf]
      %v1878 = vld [vmem:[%s5 + $0x58] sm:$0xf]
      %v1879 = vld [vmem:[%s5 + $0x5c] sm:$0xf]
      %v1880 = vld [vmem:[%s5 + $0x60] sm:$0xf]
      %v1881 = vld [vmem:[%s5 + $0x64] sm:$0xf]
      %v1882 = vld [vmem:[%s5 + $0x68] sm:$0xf]
      %v1883 = vld [vmem:[%s5 + $0x6c] sm:$0xf]
      %v1884 = vld [vmem:[%s5 + $0x70] sm:$0xf]
      %v1885 = vld [vmem:[%s5 + $0x74] sm:$0xf]
      %v1886 = vld [vmem:[%s5 + $0x78] sm:$0xf]
      %v1887 = vld [vmem:[%s5 + $0x7c] sm:$0xf]
      %v1888 = vld [vmem:[%s6] sm:$0x1]
      %v1890 = vlaneseq
      %v1891 = vshrl.u32 %v1890, 7
      %v1892 = vsub.s32 0, %v1891
      %v1893 = vrot.slane %v1888, %v1892
      %v1927 = vunpack.c.l.b16 %v1856
      %v1928 = vunpack.c.l.b16 %v1857
      %v1929 = vunpack.c.l.b16 %v1858
      %v1930 = vunpack.c.l.b16 %v1859
      %v1931 = vunpack.c.l.b16 %v1860
      %v1932 = vunpack.c.l.b16 %v1861
      %v1933 = vunpack.c.l.b16 %v1862
      %v1934 = vunpack.c.l.b16 %v1863
      %v1935 = vunpack.c.l.b16 %v1864
      %v1936 = vunpack.c.l.b16 %v1865
      %v1937 = vunpack.c.l.b16 %v1866
      %v1938 = vunpack.c.l.b16 %v1867
      %v1939 = vunpack.c.l.b16 %v1868
      %v1940 = vunpack.c.l.b16 %v1869
      %v1941 = vunpack.c.l.b16 %v1870
      %v1942 = vunpack.c.l.b16 %v1871
      %v1943 = vunpack.c.l.b16 %v1872
      %v1944 = vunpack.c.l.b16 %v1873
      %v1945 = vunpack.c.l.b16 %v1874
      %v1946 = vunpack.c.l.b16 %v1875
      %v1947 = vunpack.c.l.b16 %v1876
      %v1948 = vunpack.c.l.b16 %v1877
      %v1949 = vunpack.c.l.b16 %v1878
      %v1950 = vunpack.c.l.b16 %v1879
      %v1951 = vunpack.c.l.b16 %v1880
      %v1952 = vunpack.c.l.b16 %v1881
      %v1953 = vunpack.c.l.b16 %v1882
      %v1954 = vunpack.c.l.b16 %v1883
      %v1955 = vunpack.c.l.b16 %v1884
      %v1956 = vunpack.c.l.b16 %v1885
      %v1957 = vunpack.c.l.b16 %v1886
      %v1958 = vunpack.c.l.b16 %v1887
      %v1959 = vpack.c.b16 %v1928, %v1927
      %v1960 = vpack.c.b16 %v1930, %v1929
      %v1961 = vpack.c.b16 %v1932, %v1931
      %v1962 = vpack.c.b16 %v1934, %v1933
      %v1963 = vpack.c.b16 %v1936, %v1935
      %v1964 = vpack.c.b16 %v1938, %v1937
      %v1965 = vpack.c.b16 %v1940, %v1939
      %v1966 = vpack.c.b16 %v1942, %v1941
      %v1967 = vpack.c.b16 %v1944, %v1943
      %v1968 = vpack.c.b16 %v1946, %v1945
      %v1969 = vpack.c.b16 %v1948, %v1947
      %v1970 = vpack.c.b16 %v1950, %v1949
      %v1971 = vpack.c.b16 %v1952, %v1951
      %v1972 = vpack.c.b16 %v1954, %v1953
      %v1973 = vpack.c.b16 %v1956, %v1955
      %v1974 = vpack.c.b16 %v1958, %v1957
      %1991 = vmatprep.subr.bf16.mxu0 0
      %1992 = vmatpush1.bf16.msra.mxu0 %v1959
      %1993 = vmatprep.subr.bf16.mxu0 0
      %1994 = vmatpush1.bf16.msra.mxu0 %v1960
      %1995 = vmatprep.subr.bf16.mxu0 0
      %1996 = vmatpush1.bf16.msra.mxu0 %v1961
      %1997 = vmatprep.subr.bf16.mxu0 0
      %1998 = vmatpush1.bf16.msra.mxu0 %v1962
      %1999 = vmatprep.subr.bf16.mxu0 0
      %2000 = vmatpush1.bf16.msra.mxu0 %v1963
      %2001 = vmatprep.subr.bf16.mxu0 0
      %2002 = vmatpush1.bf16.msra.mxu0 %v1964
      %2003 = vmatprep.subr.bf16.mxu0 0
      %2004 = vmatpush1.bf16.msra.mxu0 %v1965
      %2005 = vmatprep.subr.bf16.mxu0 0
      %2006 = vmatpush1.bf16.msra.mxu0 %v1966
      %2007 = vmatprep.subr.bf16.mxu0 0
      %2008 = vmatpush1.bf16.msra.mxu0 %v1967
      %2009 = vmatprep.subr.bf16.mxu0 0
      %2010 = vmatpush1.bf16.msra.mxu0 %v1968
      %2011 = vmatprep.subr.bf16.mxu0 0
      %2012 = vmatpush1.bf16.msra.mxu0 %v1969
      %2013 = vmatprep.subr.bf16.mxu0 0
      %2014 = vmatpush1.bf16.msra.mxu0 %v1970
      %2015 = vmatprep.subr.bf16.mxu0 0
      %2016 = vmatpush1.bf16.msra.mxu0 %v1971
      %2017 = vmatprep.subr.bf16.mxu0 0
      %2018 = vmatpush1.bf16.msra.mxu0 %v1972
      %2019 = vmatprep.subr.bf16.mxu0 0
      %2020 = vmatpush1.bf16.msra.mxu0 %v1973
      %2021 = vmatprep.subr.bf16.mxu0 0
      %2022 = vmatpush1.bf16.msra.mxu0 %v1974
      %2023 = vmatprep.mubr.bf16.mxu0 %v482
      %2024 = vmatmul.mubr.bf16.gmra.mrb[0].mxu0 %v481
      %v2025 = vpop.f32.mrb[0].mxu0
      %v2026 = vadd.f32 %v1893, %v2025
      %v2027 = vpop.f32.mrb[0].mxu0
      %v2028 = vpop.f32.mrb[0].mxu0
      %v2029 = vadd.f32 %v1893, %v2028
      %v2030 = vpop.f32.mrb[0].mxu0
      %2031 = vmatprep.mubr.bf16.mxu0 %v484
      %2032 = vmatmul.mubr.bf16.gmra.mrb[0].mxu0 %v483
      %v2033 = vpop.f32.mrb[0].mxu0
      %v2034 = vadd.f32 %v1893, %v2033
      %v2035 = vpop.f32.mrb[0].mxu0
      %v2036 = vpop.f32.mrb[0].mxu0
      %v2037 = vpop.f32.mrb[0].mxu0
      %2038 = vdwg.mxu0
      %vm2039 = vcmp.gt.f32.partialorder %v2026, 0.0
      %vm2040 = vcmp.gt.f32.partialorder %v2029, 0.0
      %vm2041 = vcmp.gt.f32.partialorder %v2034, 0.0
      %v2042 = vmin.f32 %v2026, 0.0
      %v2043 = vmin.f32 %v2029, 0.0
      %v2044 = vmin.f32 %v2034, 0.0
      %v2045 = vmul.f32 %v2042, 1.442695
      %v2046 = vpow.pop %v2045
      %v2047 = vmul.f32 %v2043, 1.442695
      %v2048 = vpow.pop %v2047
      %v2049 = vmul.f32 %v2044, 1.442695
      %v2050 = vpow.pop %v2049
      %v2051 = vsub.f32 %v2046, 1.0
      %v2052 = vsub.f32 %v2048, 1.0
      %v2053 = vsub.f32 %v2050, 1.0
      %v2054 = vsel %vm2039, %v2026, %v2051
      %v2055 = vsel %vm2040, %v2029, %v2052
      %v2056 = vsel %vm2041, %v2034, %v2053
      %v2057 = vpack.c.bf16 %v2055, %v2054
      %v2058 = vpack.c.bf16 %v2056, %v2056
      %v2059 = vld [vmem:[%s7] sm:$0xf]
      %v2060 = vld [vmem:[%s7 + $0x4] sm:$0xf]
      %v2061 = vld [vmem:[%s7 + $0x8] sm:$0xf]
      %v2062 = vld [vmem:[%s7 + $0xc] sm:$0xf]
      %v2063 = vld [vmem:[%s7 + $0x10] sm:$0xf]
      %v2064 = vld [vmem:[%s7 + $0x14] sm:$0xf]
      %v2065 = vld [vmem:[%s7 + $0x18] sm:$0xf]
      %v2066 = vld [vmem:[%s7 + $0x1c] sm:$0xf]
      %v2067 = vld [vmem:[%s8] sm:$0x1]
      %v2069 = vlaneseq
      %v2070 = vshrl.u32 %v2069, 7
      %v2071 = vsub.s32 0, %v2070
      %v2072 = vrot.slane %v2067, %v2071
      %v2082 = vunpack.c.l.b16 %v2059
      %v2083 = vunpack.c.l.b16 %v2060
      %v2084 = vunpack.c.l.b16 %v2061
      %v2085 = vunpack.c.l.b16 %v2062
      %v2086 = vunpack.c.l.b16 %v2063
      %v2087 = vunpack.c.l.b16 %v2064
      %v2088 = vunpack.c.l.b16 %v2065
      %v2089 = vunpack.c.l.b16 %v2066
      %v2090 = vpack.c.b16 %v2083, %v2082
      %v2091 = vpack.c.b16 %v2085, %v2084
      %v2092 = vpack.c.b16 %v2087, %v2086
      %v2093 = vpack.c.b16 %v2089, %v2088
      %v2099 = vsel %vm1848, %v2057, 0
      %v2102 = vsel %vm1848, %v2058, 0
      %2104 = vmatprep.subr.bf16.mxu0 0
      %2105 = vmatpush1.bf16.msra.mxu0 %v2090
      %2106 = vmatprep.subr.bf16.mxu0 0
      %2107 = vmatpush1.bf16.msra.mxu0 %v2091
      %2108 = vmatprep.subr.bf16.mxu0 0
      %2109 = vmatpush1.bf16.msra.mxu0 %v2092
      %2110 = vmatprep.subr.bf16.mxu0 0
      %2111 = vmatpush1.bf16.msra.mxu0 %v2093
      %2112 = vmatprep.subr.bf16.mxu0 0
      %2113 = vmatpush1.bf16.msra.mxu0 0
      %2114 = vmatprep.subr.bf16.mxu0 0
      %2115 = vmatpush1.bf16.msra.mxu0 0
      %2116 = vmatprep.subr.bf16.mxu0 0
      %2117 = vmatpush1.bf16.msra.mxu0 0
      %2118 = vmatprep.subr.bf16.mxu0 0
      %2119 = vmatpush1.bf16.msra.mxu0 0
      %2120 = vmatprep.subr.bf16.mxu0 0
      %2121 = vmatpush1.bf16.msra.mxu0 0
      %2122 = vmatprep.subr.bf16.mxu0 0
      %2123 = vmatpush1.bf16.msra.mxu0 0
      %2124 = vmatprep.subr.bf16.mxu0 0
      %2125 = vmatpush1.bf16.msra.mxu0 0
      %2126 = vmatprep.subr.bf16.mxu0 0
      %2127 = vmatpush1.bf16.msra.mxu0 0
      %2128 = vmatprep.subr.bf16.mxu0 0
      %2129 = vmatpush1.bf16.msra.mxu0 0
      %2130 = vmatprep.subr.bf16.mxu0 0
      %2131 = vmatpush1.bf16.msra.mxu0 0
      %2132 = vmatprep.subr.bf16.mxu0 0
      %2133 = vmatpush1.bf16.msra.mxu0 0
      %2134 = vmatprep.subr.bf16.mxu0 0
      %2135 = vmatpush1.bf16.msra.mxu0 0
      %2136 = vmatprep.mubr.bf16.mxu0 0
      %2137 = vmatmul.mubr.bf16.gmra.mrb[0].mxu0 %v2099
      %v2138 = vpop.f32.mrb[0].mxu0
      %v2139 = vadd.f32 %v2072, %v2138
      %v2140 = vpop.f32.mrb[0].mxu0
      %v2141 = vpop.f32.mrb[0].mxu0
      %v2142 = vadd.f32 %v2072, %v2141
      %v2143 = vpop.f32.mrb[0].mxu0
      %2144 = vmatprep.mubr.bf16.mxu0 0
      %2145 = vmatmul.mubr.bf16.gmra.mrb[0].mxu0 %v2102
      %v2146 = vpop.f32.mrb[0].mxu0
      %v2147 = vadd.f32 %v2072, %v2146
      %v2148 = vpop.f32.mrb[0].mxu0
      %v2149 = vpop.f32.mrb[0].mxu0
      %v2150 = vpop.f32.mrb[0].mxu0
      %2151 = vdwg.mxu0
      %2152 = vst [vmem:[%s380] sm:$0xff] %v2139
      %2153 = vst [vmem:[%s380 + $0x8] sm:$0xff] %v2142
      %2154 = vst [vmem:[%s380 + $0x10] sm:$0xff] %v2147
      %s2155 = smul.u32 3, %s22
      %p2156 = scmp.lt.s32.totalorder %s2155, 5
      %s2157 = scalar_select %p2156, %s2155, 5
      %s2158 = smul.addr %s2157, 3
      %s2159 = smul.addr %s2158, 8
      %s2160 = scalar_lea.vmem %s9, %s2159
      %s2161 = smul.u32 3, %s22
      %p2162 = scmp.lt.s32.totalorder %s2161, 5
      %s2163 = scalar_select %p2162, %s2161, 5
      %s2164 = smul.addr %s2163, 8
      %s2165 = scalar_lea.vmem %s10, %s2164
      // Predicated region
      $region57: #{gmm_predictor.1} parent=55 // pred_check
        %p2166 = pneg %p234
      $region58: #{gmm_predictor.1} parent=55 // pred_check_branch
        %2168 = sbr.rel (%p2166) target = $region60
      $region59: #{gmm_predictor.1} parent=55 // pred_region
        %s2169 = smul.u32 3, %s22
      $region60: #{gmm_predictor.1} parent=55 // pred_fallthru
        _
      // Predicated region
      $region61: #{gmm_predictor.1} parent=55 // pred_check
        %p2170 = pneg %p260
      $region62: #{gmm_predictor.1} parent=55 // pred_check_branch
        %2172 = sbr.rel (%p2170) target = $region64
      $region63: #{gmm_predictor.1} parent=55 // pred_region
        %s2173 = smul.u32 3, %s22
      $region64: #{gmm_predictor.1} parent=55 // pred_fallthru
        _
    $region56: #{gmm_predictor.1} parent=5 // pred_fallthru
      _
    %p2174 = scmp.le.s32.totalorder 2, %s17
    // Predicated region
    $region65: #{gmm_predictor.1} parent=5 // pred_check
      %p2175 = pneg %p2174
    $region66: #{gmm_predictor.1} parent=5 // pred_check_branch
      %2177 = sbr.rel (%p2175) target = $region68
    $region67: #{gmm_predictor.1} parent=5 // pred_region
      %s2178 = ssub.s32 %s17, 2
      // Predicated region
      $region69: #{gmm_predictor.1} parent=67 // pred_check
        %p2179 = pneg %p240
      $region70: #{gmm_predictor.1} parent=67 // pred_check_branch
        %2181 = sbr.rel (%p2179) target = $region72
      $region71: #{gmm_predictor.1} parent=67 // pred_region
        %s2182 = smul.u32 3, %s23
        %p2183 = scmp.lt.s32.totalorder %s2182, 5
        %s2184 = scalar_select %p2183, %s2182, 5
        %s2185 = smul.addr %s2184, 3
        %s2186 = smul.addr %s2185, 8
        %s2187 = scalar_lea.vmem %s9, %s2186
      $region72: #{gmm_predictor.1} parent=67 // pred_fallthru
        _
      // Predicated region
      $region73: #{gmm_predictor.1} parent=67 // pred_check
        %p2188 = pneg %p266
      $region74: #{gmm_predictor.1} parent=67 // pred_check_branch
        %2190 = sbr.rel (%p2188) target = $region76
      $region75: #{gmm_predictor.1} parent=67 // pred_region
        %s2191 = smul.u32 3, %s23
        %p2192 = scmp.lt.s32.totalorder %s2191, 5
        %s2193 = scalar_select %p2192, %s2191, 5
        %s2194 = smul.addr %s2193, 8
        %s2195 = scalar_lea.vmem %s10, %s2194
      $region76: #{gmm_predictor.1} parent=67 // pred_fallthru
        _
    $region68: #{gmm_predictor.1} parent=5 // pred_fallthru
      _
  $region6: #{gmm_predictor.1} parent=0 // loop_footer
    %s21 = sadd.s32 1, %s17
  $region7: #{gmm_predictor.1} parent=0 // loop_footer_branch
    %16 = sbr.rel target = $region3
  $region8: #{gmm_predictor.1} parent=0 // loop_exit
    _

</llo_original>
